<compile_context>
chip_gen: v7x
topology: tpu7x:2x2x1
jax: 0.10.0
libtpu: 0.0.40
codegen_flags: <defaults>
</compile_context>

<pallas_src>
import functools

import jax
import jax.numpy as jnp
from jax.experimental import pallas as pl
from jax.experimental.pallas import tpu as pltpu


# --------------------------------------------------------------------------- kernel
def _attention_body(x_ref, ctx_ref, wq_ref, wk_ref, wv_ref, wo_ref, bo_ref,
                    o_ref, q_scr, m_scr, l_scr, acc_scr,
                    *, heads, dim_head, scale):
    """One (batch, q-tile, kv-tile) grid step of flash attention.

    x_ref:   (1, tq, Dq)       ctx_ref: (1, tk, Dc)
    wq_ref:  (Dq, inner)       wk_ref / wv_ref: (Dc, inner)   (pre-transposed Din x Dout)
    wo_ref:  (inner, Dq)       bo_ref:  (1, Dq)
    o_ref:   (1, tq, Dq)
    q_scr:   (tq, inner)       m_scr / l_scr: (heads, tq, 1) f32
    acc_scr: (heads, tq, dim_head) f32
    """
    kv_step = pl.program_id(2)
    cdt = x_ref.dtype                      # MXU operand dtype (bf16 stays bf16)

    # ---- start of this (b, q-tile)'s kv loop: project q once, reset state ----
    @pl.when(kv_step == 0)
    def _init():
        x = x_ref[0]                                                # (tq, Dq)
        q = jnp.dot(x, wq_ref[...],
                    preferred_element_type=jnp.float32) * scale     # scale before QK
        q_scr[...] = q.astype(q_scr.dtype)
        m_scr[...] = jnp.full(m_scr.shape, -jnp.inf, dtype=m_scr.dtype)
        l_scr[...] = jnp.zeros(l_scr.shape, dtype=l_scr.dtype)
        acc_scr[...] = jnp.zeros(acc_scr.shape, dtype=acc_scr.dtype)

    # ---- project this kv tile: separate K / V matmuls (no lane-offset split) ----
    ctx = ctx_ref[0]                                                # (tk, Dc)
    k = jnp.dot(ctx, wk_ref[...], preferred_element_type=jnp.float32).astype(cdt)
    v = jnp.dot(ctx, wv_ref[...], preferred_element_type=jnp.float32).astype(cdt)
    q = q_scr[...]                                                  # (tq, inner)

    # Contract the last dim of both operands -> no k transpose / relayout.
    qk_dims = (((1,), (1,)), ((), ()))

    # Static unroll over heads.  With dim_head % 128 == 0 these slices are
    # whole-vreg selects (no XLU lane shuffles) and K = dim_head fills the MXU.
    for h in range(heads):
        sl = slice(h * dim_head, (h + 1) * dim_head)
        s = jax.lax.dot_general(q[:, sl], k[:, sl], qk_dims,
                                preferred_element_type=jnp.float32)  # (tq, tk) f32
        # TODO(synk): boolean `mask` branch (masked_fill with -finfo.max) goes here.
        m_prev = m_scr[h]                                            # (tq, 1)
        m_new = jnp.maximum(m_prev, jnp.max(s, axis=-1, keepdims=True))
        alpha = jnp.exp(m_prev - m_new)
        p = jnp.exp(s - m_new)                                       # (tq, tk) f32
        l_scr[h] = alpha * l_scr[h] + jnp.sum(p, axis=-1, keepdims=True)
        acc_scr[h] = alpha * acc_scr[h] + jnp.dot(
            p.astype(cdt), v[:, sl], preferred_element_type=jnp.float32)
        m_scr[h] = m_new
        # dropout == 0.0 -> identity (asserted in the wrapper).

    # ---- end of kv loop: normalize, fused output projection, single store ----
    @pl.when(kv_step == pl.num_programs(2) - 1)
    def _finalize():
        tq, dq = o_ref.shape[1], o_ref.shape[2]
        wo = wo_ref[...]                                             # (inner, Dq)
        out = jnp.zeros((tq, dq), jnp.float32) + bo_ref[...].astype(jnp.float32)
        for h in range(heads):
            sl = slice(h * dim_head, (h + 1) * dim_head)
            o_h = acc_scr[h] * pl.reciprocal(l_scr[h], approx=True)  # EUP, not VALU div
            # Per-head partial of the output projection (sublane-aligned weight
            # slice, lane-dense Dq output) -> no head concat, no per-head recasts.
            out = out + jnp.dot(o_h.astype(cdt), wo[sl, :],
                                preferred_element_type=jnp.float32)
        o_ref[0] = out.astype(o_ref.dtype)


def _cross_attention_kernel(x_ref, ctx_ref, *rest, heads, dim_head, scale):
    _attention_body(x_ref, ctx_ref, *rest,
                    heads=heads, dim_head=dim_head, scale=scale)


def _self_attention_kernel(x_ref, *rest, heads, dim_head, scale):
    # Self-attention fast path: x is passed once; the same resident VMEM block
    # feeds both the q and the k/v projections (halves activation DMA).
    _attention_body(x_ref, x_ref, *rest,
                    heads=heads, dim_head=dim_head, scale=scale)


# --------------------------------------------------------------------------- wrapper
def attention_forward(x, params, heads, dim_head, context=None, mask=None,
                      dropout=0.0, q_tile=256, kv_tile=512):
    """Attention.forward(x, context=None, mask=None) as one flash-tiled pallas_call."""
    if mask is not None:
        raise NotImplementedError("TODO(synk): boolean mask path not implemented")
    if dropout != 0.0:
        raise NotImplementedError("TODO(synk): attention dropout not implemented")

    B, N, Dq = x.shape
    inner = heads * dim_head
    scale = float(dim_head) ** -0.5
    self_attn = context is None
    if self_attn:
        context = x
    M, Dc = context.shape[1], context.shape[2]

    # Tile sizes: fall back to a single (untiled) block when the tile does not
    # divide the length -- keeps correctness without a ragged-tile mask.
    # TODO(synk): masked ragged last kv tile so huge non-divisible M still tiles.
    tq = q_tile if (N > q_tile and N % q_tile == 0) else N
    tk = kv_tile if (M > kv_tile and M % kv_tile == 0) else M
    num_q, num_kv = N // tq, M // tk

    # Self fast path only when one resident x block serves both roles.
    use_self_path = self_attn and num_q == 1 and num_kv == 1

    scratch_shapes = [
        pltpu.VMEM((tq, inner), x.dtype),                 # scaled q, resident over kv
        pltpu.VMEM((heads, tq, 1), jnp.float32),          # running max  m
        pltpu.VMEM((heads, tq, 1), jnp.float32),          # running sum  l
        pltpu.VMEM((heads, tq, dim_head), jnp.float32),   # running (unnormalized) o
    ]
    # Constant-index weights (re-used every grid step).
    # TODO(synk): mark these pipeline_mode=pl.Buffered(1) to halve their VMEM
    # residency once single-buffering of constant-index inputs is stable.
    weight_specs = [
        pl.BlockSpec((Dq, inner), lambda b, qi, kv: (0, 0)),        # wq_t
        pl.BlockSpec((Dc, inner), lambda b, qi, kv: (0, 0)),        # wk_t
        pl.BlockSpec((Dc, inner), lambda b, qi, kv: (0, 0)),        # wv_t
        pl.BlockSpec((inner, Dq), lambda b, qi, kv: (0, 0)),        # wo_t
        pl.BlockSpec((1, Dq), lambda b, qi, kv: (0, 0)),            # bo
    ]
    out_spec = pl.BlockSpec((1, tq, Dq), lambda b, qi, kv: (b, qi, 0))
    out_shape = jax.ShapeDtypeStruct((B, N, Dq), x.dtype)
    compiler_params = pltpu.CompilerParams(
        dimension_semantics=("parallel", "parallel", "arbitrary"),
        vmem_limit_bytes=64 * 1024 * 1024)
    weights = (params["wq_t"], params["wk_t"], params["wv_t"],
               params["wo_t"], params["bo"])

    if use_self_path:
        kernel = functools.partial(_self_attention_kernel,
                                   heads=heads, dim_head=dim_head, scale=scale)
        return pl.pallas_call(
            kernel,
            out_shape=out_shape,
            grid=(B, 1, 1),
            in_specs=[pl.BlockSpec((1, N, Dq), lambda b, qi, kv: (b, 0, 0))]
                     + weight_specs,
            out_specs=out_spec,
            scratch_shapes=scratch_shapes,
            compiler_params=compiler_params,
        )(x, *weights)

    kernel = functools.partial(_cross_attention_kernel,
                               heads=heads, dim_head=dim_head, scale=scale)
    return pl.pallas_call(
        kernel,
        out_shape=out_shape,
        grid=(B, num_q, num_kv),
        in_specs=[pl.BlockSpec((1, tq, Dq), lambda b, qi, kv: (b, qi, 0)),
                  pl.BlockSpec((1, tk, Dc), lambda b, qi, kv: (b, kv, 0))]
                 + weight_specs,
        out_specs=out_spec,
        scratch_shapes=scratch_shapes,
        compiler_params=compiler_params,
    )(x, context, *weights)


def init_params(key, query_dim, context_dim, heads, dim_head):
    """PyTorch nn.Linear default init; weights stored pre-transposed (Din, Dout)."""
    inner = heads * dim_head
    k1, k2, k3, k4 = jax.random.split(key, 4)

    def uni(k, shape, fan_in):
        bound = 1.0 / jnp.sqrt(fan_in)
        return jax.random.uniform(k, shape, jnp.float32, -bound, bound)

    wq = uni(k1, (inner, query_dim), query_dim)             # to_q.weight   (Dout, Din)
    wkv = uni(k2, (2 * inner, context_dim), context_dim)    # to_kv.weight
    wo = uni(k3, (query_dim, inner), inner)                 # to_out.weight
    bo = uni(k4, (query_dim,), inner)                       # to_out.bias

    return {
        "wq_t": wq.T,                     # (Dq, inner)
        "wk_t": wkv[:inner].T,            # (Dc, inner)  split BEFORE transpose:
        "wv_t": wkv[inner:].T,            #   no in-kernel lane-offset kv slice
        "wo_t": wo.T,                     # (inner, Dq)
        "bo": bo.reshape(1, query_dim),
    }


# --------------------------------------------------------------------------- reference
def reference_attention(x, params, heads, dim_head, context=None):
    """Pure-JAX mirror of the PyTorch Attention.forward (mask=None, dropout=0)."""
    if context is None:
        context = x
    B, N, _ = x.shape
    inner = heads * dim_head
    scale = float(dim_head) ** -0.5
    q = x @ params["wq_t"]
    k = context @ params["wk_t"]
    v = context @ params["wv_t"]

    def split_heads(t):
        b, n, _ = t.shape
        return t.reshape(b, n, heads, dim_head).transpose(0, 2, 1, 3)

    qh, kh, vh = split_heads(q), split_heads(k), split_heads(v)
    sim = jnp.einsum("bhid,bhjd->bhij", qh, kh) * scale
    attn = jax.nn.softmax(sim, axis=-1)
    o = jnp.einsum("bhij,bhjd->bhid", attn, vh)
    o = o.transpose(0, 2, 1, 3).reshape(B, N, inner)
    return o @ params["wo_t"] + params["bo"]


# --------------------------------------------------------------------------- main
if __name__ == "__main__":
    B, N, M = 2, 8, 16
    query_dim = 128
    context_dim = 128
    heads, dim_head = 4, 128      # inner = 512; all feature dims multiples of 128

    key = jax.random.PRNGKey(0)
    kx, kc, kp = jax.random.split(key, 3)
    x = jax.random.normal(kx, (B, N, query_dim), jnp.float32)
    ctx = jax.random.normal(kc, (B, M, context_dim), jnp.float32)
    params = init_params(kp, query_dim, context_dim, heads, dim_head)

    # Self-attention (context=None -> single-pass x fast path).
    fwd_self = jax.jit(lambda xx, pp: attention_forward(xx, pp, heads, dim_head))
    # Cross-attention, kv_tile=8 forces two kv tiles -> exercises online softmax.
    fwd_cross = jax.jit(lambda xx, cc, pp: attention_forward(
        xx, pp, heads, dim_head, context=cc, kv_tile=8))

    out_self = jax.block_until_ready(fwd_self(x, params))
    out_cross = jax.block_until_ready(fwd_cross(x, ctx, params))

    ref_self = reference_attention(x, params, heads, dim_head)
    ref_cross = reference_attention(x, params, heads, dim_head, context=ctx)

    assert out_self.shape == (B, N, query_dim)
    assert out_cross.shape == (B, N, query_dim)
    # approx=True reciprocal (EUP) + online-softmax reassociation -> loosened tol.
    err_s = float(jnp.max(jnp.abs(out_self - ref_self)))
    err_c = float(jnp.max(jnp.abs(out_cross - ref_cross)))
    assert jnp.allclose(out_self, ref_self, atol=2e-3, rtol=2e-3), err_s
    assert jnp.allclose(out_cross, ref_cross, atol=2e-3, rtol=2e-3), err_c
    print("KERNEL_OK")
</pallas_src>

<mosaic_0001>
module attributes {stable_mosaic.version = 11 : i64} {
  func.func @_self_attention_kernel(%arg0: i32, %arg1: i32, %arg2: i32, %arg3: memref<1x8x128xf32, #tpu.memory_space<vmem>>, %arg4: memref<128x512xf32, #tpu.memory_space<vmem>>, %arg5: memref<128x512xf32, #tpu.memory_space<vmem>>, %arg6: memref<128x512xf32, #tpu.memory_space<vmem>>, %arg7: memref<512x128xf32, #tpu.memory_space<vmem>>, %arg8: memref<1x128xf32, #tpu.memory_space<vmem>>, %arg9: memref<1x8x128xf32, #tpu.memory_space<vmem>>, %arg10: memref<8x512xf32, #tpu.memory_space<vmem>>, %arg11: memref<4x8x1xf32, #tpu.memory_space<vmem>>, %arg12: memref<4x8x1xf32, #tpu.memory_space<vmem>>, %arg13: memref<4x8x128xf32, #tpu.memory_space<vmem>>) attributes {dimension_semantics = [#tpu.dimension_semantics<parallel>, #tpu.dimension_semantics<parallel>, #tpu.dimension_semantics<arbitrary>], iteration_bounds = array<i64: 2, 1, 1>, scalar_prefetch = 0 : i64, scratch_operands = 4 : i64, tpu.core_type = #tpu.core_type<tc>, window_params = [{transform_indices = @transform_0, window_bounds = array<i64: 1, 8, 128>}, {pipeline_mode = #tpu.pipeline_mode<synchronous>, transform_indices = @transform_1, window_bounds = array<i64: 128, 512>}, {pipeline_mode = #tpu.pipeline_mode<synchronous>, transform_indices = @transform_2, window_bounds = array<i64: 128, 512>}, {pipeline_mode = #tpu.pipeline_mode<synchronous>, transform_indices = @transform_3, window_bounds = array<i64: 128, 512>}, {pipeline_mode = #tpu.pipeline_mode<synchronous>, transform_indices = @transform_4, window_bounds = array<i64: 512, 128>}, {pipeline_mode = #tpu.pipeline_mode<synchronous>, transform_indices = @transform_5, window_bounds = array<i64: 1, 128>}, {transform_indices = @transform_6, window_bounds = array<i64: 1, 8, 128>}]} {
    %c0_i32 = arith.constant 0 : i32
    %0 = arith.cmpi eq, %arg2, %c0_i32 : i32
    %1 = arith.extui %0 : i1 to i32
    %c0_i32_0 = arith.constant 0 : i32
    %2 = arith.cmpi ne, %1, %c0_i32_0 : i32
    scf.if %2 {
      %c0_97 = arith.constant 0 : index
      %c0_98 = arith.constant 0 : index
      %c0_99 = arith.constant 0 : index
      %153 = vector.load %arg3[%c0_97, %c0_98, %c0_99] : memref<1x8x128xf32, #tpu.memory_space<vmem>>, vector<1x8x128xf32>
      %154 = vector.shape_cast %153 : vector<1x8x128xf32> to vector<8x128xf32>
      %c0_100 = arith.constant 0 : index
      %c0_101 = arith.constant 0 : index
      %155 = vector.load %arg4[%c0_100, %c0_101] : memref<128x512xf32, #tpu.memory_space<vmem>>, vector<128x512xf32>
      %cst_102 = arith.constant dense<0.000000e+00> : vector<8x512xf32>
      %156 = tpu.matmul %154, %155, %cst_102 {dimension_numbers = #tpu.dot_dimension_numbers<[1], [0], [0], [1], [0, 0, 1, 1], [], []>} : vector<8x128xf32>, vector<128x512xf32>, vector<8x512xf32> -> vector<8x512xf32>
      %cst_103 = arith.constant 0.0883883461 : f32
      %157 = vector.broadcast %cst_103 : f32 to vector<8x512xf32>
      %158 = arith.mulf %156, %157 : vector<8x512xf32>
      %c0_104 = arith.constant 0 : index
      %c0_105 = arith.constant 0 : index
      %159 = vector.load %arg10[%c0_104, %c0_105] : memref<8x512xf32, #tpu.memory_space<vmem>>, vector<8x512xf32>
      tpu.vector_store %arg10[%c0_104, %c0_105], %158 {strides = array<i32>} : memref<8x512xf32, #tpu.memory_space<vmem>>, vector<8x512xf32>,
      %cst_106 = arith.constant 0xFF800000 : f32
      %160 = vector.broadcast %cst_106 : f32 to vector<4x8x1xf32>
      %c0_107 = arith.constant 0 : index
      %c0_108 = arith.constant 0 : index
      %c0_109 = arith.constant 0 : index
      %161 = vector.load %arg11[%c0_107, %c0_108, %c0_109] : memref<4x8x1xf32, #tpu.memory_space<vmem>>, vector<4x8x1xf32>
      tpu.vector_store %arg11[%c0_107, %c0_108, %c0_109], %160 {strides = array<i32>} : memref<4x8x1xf32, #tpu.memory_space<vmem>>, vector<4x8x1xf32>,
      %cst_110 = arith.constant 0.000000e+00 : f32
      %162 = vector.broadcast %cst_110 : f32 to vector<4x8x1xf32>
      %c0_111 = arith.constant 0 : index
      %c0_112 = arith.constant 0 : index
      %c0_113 = arith.constant 0 : index
      %163 = vector.load %arg12[%c0_111, %c0_112, %c0_113] : memref<4x8x1xf32, #tpu.memory_space<vmem>>, vector<4x8x1xf32>
      tpu.vector_store %arg12[%c0_111, %c0_112, %c0_113], %162 {strides = array<i32>} : memref<4x8x1xf32, #tpu.memory_space<vmem>>, vector<4x8x1xf32>,
      %cst_114 = arith.constant 0.000000e+00 : f32
      %164 = vector.broadcast %cst_114 : f32 to vector<4x8x128xf32>
      %c0_115 = arith.constant 0 : index
      %c0_116 = arith.constant 0 : index
      %c0_117 = arith.constant 0 : index
      %165 = vector.load %arg13[%c0_115, %c0_116, %c0_117] : memref<4x8x128xf32, #tpu.memory_space<vmem>>, vector<4x8x128xf32>
      tpu.vector_store %arg13[%c0_115, %c0_116, %c0_117], %164 {strides = array<i32>} : memref<4x8x128xf32, #tpu.memory_space<vmem>>, vector<4x8x128xf32>,
    } else {
    }
    %c0 = arith.constant 0 : index
    %c0_1 = arith.constant 0 : index
    %c0_2 = arith.constant 0 : index
    %3 = vector.load %arg3[%c0, %c0_1, %c0_2] : memref<1x8x128xf32, #tpu.memory_space<vmem>>, vector<1x8x128xf32>
    %4 = vector.shape_cast %3 : vector<1x8x128xf32> to vector<8x128xf32>
    %c0_3 = arith.constant 0 : index
    %c0_4 = arith.constant 0 : index
    %5 = vector.load %arg5[%c0_3, %c0_4] : memref<128x512xf32, #tpu.memory_space<vmem>>, vector<128x512xf32>
    %cst = arith.constant dense<0.000000e+00> : vector<8x512xf32>
    %6 = tpu.matmul %4, %5, %cst {dimension_numbers = #tpu.dot_dimension_numbers<[1], [0], [0], [1], [0, 0, 1, 1], [], []>} : vector<8x128xf32>, vector<128x512xf32>, vector<8x512xf32> -> vector<8x512xf32>
    %c0_5 = arith.constant 0 : index
    %c0_6 = arith.constant 0 : index
    %7 = vector.load %arg6[%c0_5, %c0_6] : memref<128x512xf32, #tpu.memory_space<vmem>>, vector<128x512xf32>
    %cst_7 = arith.constant dense<0.000000e+00> : vector<8x512xf32>
    %8 = tpu.matmul %4, %7, %cst_7 {dimension_numbers = #tpu.dot_dimension_numbers<[1], [0], [0], [1], [0, 0, 1, 1], [], []>} : vector<8x128xf32>, vector<128x512xf32>, vector<8x512xf32> -> vector<8x512xf32>
    %c0_8 = arith.constant 0 : index
    %c0_9 = arith.constant 0 : index
    %9 = vector.load %arg10[%c0_8, %c0_9] : memref<8x512xf32, #tpu.memory_space<vmem>>, vector<8x512xf32>
    %10 = vector.extract_strided_slice %9 {offsets = [0, 0], sizes = [8, 128], strides = [1, 1]} : vector<8x512xf32> to vector<8x128xf32>
    %11 = vector.extract_strided_slice %6 {offsets = [0, 0], sizes = [8, 128], strides = [1, 1]} : vector<8x512xf32> to vector<8x128xf32>
    %cst_10 = arith.constant dense<0.000000e+00> : vector<8x8xf32>
    %12 = tpu.matmul %10, %11, %cst_10 {dimension_numbers = #tpu.dot_dimension_numbers<[1], [1], [0], [0], [0, 0, 1, 0], [], []>} : vector<8x128xf32>, vector<8x128xf32>, vector<8x8xf32> -> vector<8x8xf32>
    %c0_11 = arith.constant 0 : index
    %c0_12 = arith.constant 0 : index
    %c0_13 = arith.constant 0 : index
    %13 = vector.load %arg11[%c0_11, %c0_12, %c0_13] : memref<4x8x1xf32, #tpu.memory_space<vmem>>, vector<1x8x1xf32>
    %14 = vector.shape_cast %13 : vector<1x8x1xf32> to vector<8x1xf32>
    %cst_14 = arith.constant dense<0xFF800000> : vector<8xf32>
    %15 = vector.multi_reduction <maximumf>, %12, %cst_14 [1] : vector<8x8xf32> to vector<8xf32>
    %16 = vector.shape_cast %15 : vector<8xf32> to vector<8x1xf32>
    %17 = arith.maximumf %14, %16 : vector<8x1xf32>
    %18 = arith.subf %14, %17 : vector<8x1xf32>
    %19 = math.exp %18 : vector<8x1xf32>
    %20 = vector.broadcast %17 : vector<8x1xf32> to vector<8x8xf32>
    %21 = arith.subf %12, %20 : vector<8x8xf32>
    %22 = math.exp %21 : vector<8x8xf32>
    %c0_15 = arith.constant 0 : index
    %c0_16 = arith.constant 0 : index
    %c0_17 = arith.constant 0 : index
    %23 = vector.load %arg12[%c0_15, %c0_16, %c0_17] : memref<4x8x1xf32, #tpu.memory_space<vmem>>, vector<1x8x1xf32>
    %24 = vector.shape_cast %23 : vector<1x8x1xf32> to vector<8x1xf32>
    %25 = arith.mulf %19, %24 : vector<8x1xf32>
    %cst_18 = arith.constant dense<0.000000e+00> : vector<8xf32>
    %26 = vector.multi_reduction <add>, %22, %cst_18 [1] : vector<8x8xf32> to vector<8xf32>
    %27 = vector.shape_cast %26 : vector<8xf32> to vector<8x1xf32>
    %28 = arith.addf %25, %27 : vector<8x1xf32>
    %c0_19 = arith.constant 0 : index
    %c0_20 = arith.constant 0 : index
    %c0_21 = arith.constant 0 : index
    %29 = vector.load %arg12[%c0_19, %c0_20, %c0_21] : memref<4x8x1xf32, #tpu.memory_space<vmem>>, vector<1x8x1xf32>
    %30 = vector.shape_cast %29 : vector<1x8x1xf32> to vector<8x1xf32>
    %31 = vector.shape_cast %28 : vector<8x1xf32> to vector<1x8x1xf32>
    tpu.vector_store %arg12[%c0_19, %c0_20, %c0_21], %31 {strides = array<i32>} : memref<4x8x1xf32, #tpu.memory_space<vmem>>, vector<1x8x1xf32>,
    %c0_22 = arith.constant 0 : index
    %c0_23 = arith.constant 0 : index
    %c0_24 = arith.constant 0 : index
    %32 = vector.load %arg13[%c0_22, %c0_23, %c0_24] : memref<4x8x128xf32, #tpu.memory_space<vmem>>, vector<1x8x128xf32>
    %33 = vector.shape_cast %32 : vector<1x8x128xf32> to vector<8x128xf32>
    %34 = vector.broadcast %19 : vector<8x1xf32> to vector<8x128xf32>
    %35 = arith.mulf %34, %33 : vector<8x128xf32>
    %36 = vector.extract_strided_slice %8 {offsets = [0, 0], sizes = [8, 128], strides = [1, 1]} : vector<8x512xf32> to vector<8x128xf32>
    %cst_25 = arith.constant dense<0.000000e+00> : vector<8x128xf32>
    %37 = tpu.matmul %22, %36, %cst_25 {dimension_numbers = #tpu.dot_dimension_numbers<[1], [0], [0], [1], [0, 0, 1, 1], [], []>} : vector<8x8xf32>, vector<8x128xf32>, vector<8x128xf32> -> vector<8x128xf32>
    %38 = arith.addf %35, %37 : vector<8x128xf32>
    %c0_26 = arith.constant 0 : index
    %c0_27 = arith.constant 0 : index
    %c0_28 = arith.constant 0 : index
    %39 = vector.load %arg13[%c0_26, %c0_27, %c0_28] : memref<4x8x128xf32, #tpu.memory_space<vmem>>, vector<1x8x128xf32>
    %40 = vector.shape_cast %39 : vector<1x8x128xf32> to vector<8x128xf32>
    %41 = vector.shape_cast %38 : vector<8x128xf32> to vector<1x8x128xf32>
    tpu.vector_store %arg13[%c0_26, %c0_27, %c0_28], %41 {strides = array<i32>} : memref<4x8x128xf32, #tpu.memory_space<vmem>>, vector<1x8x128xf32>,
    %c0_29 = arith.constant 0 : index
    %c0_30 = arith.constant 0 : index
    %c0_31 = arith.constant 0 : index
    %42 = vector.load %arg11[%c0_29, %c0_30, %c0_31] : memref<4x8x1xf32, #tpu.memory_space<vmem>>, vector<1x8x1xf32>
    %43 = vector.shape_cast %42 : vector<1x8x1xf32> to vector<8x1xf32>
    %44 = vector.shape_cast %17 : vector<8x1xf32> to vector<1x8x1xf32>
    tpu.vector_store %arg11[%c0_29, %c0_30, %c0_31], %44 {strides = array<i32>} : memref<4x8x1xf32, #tpu.memory_space<vmem>>, vector<1x8x1xf32>,
    %45 = vector.extract_strided_slice %9 {offsets = [0, 128], sizes = [8, 128], strides = [1, 1]} : vector<8x512xf32> to vector<8x128xf32>
    %46 = vector.extract_strided_slice %6 {offsets = [0, 128], sizes = [8, 128], strides = [1, 1]} : vector<8x512xf32> to vector<8x128xf32>
    %cst_32 = arith.constant dense<0.000000e+00> : vector<8x8xf32>
    %47 = tpu.matmul %45, %46, %cst_32 {dimension_numbers = #tpu.dot_dimension_numbers<[1], [1], [0], [0], [0, 0, 1, 0], [], []>} : vector<8x128xf32>, vector<8x128xf32>, vector<8x8xf32> -> vector<8x8xf32>
    %c1 = arith.constant 1 : index
    %c0_33 = arith.constant 0 : index
    %c0_34 = arith.constant 0 : index
    %48 = vector.load %arg11[%c1, %c0_33, %c0_34] : memref<4x8x1xf32, #tpu.memory_space<vmem>>, vector<1x8x1xf32>
    %49 = vector.shape_cast %48 : vector<1x8x1xf32> to vector<8x1xf32>
    %cst_35 = arith.constant dense<0xFF800000> : vector<8xf32>
    %50 = vector.multi_reduction <maximumf>, %47, %cst_35 [1] : vector<8x8xf32> to vector<8xf32>
    %51 = vector.shape_cast %50 : vector<8xf32> to vector<8x1xf32>
    %52 = arith.maximumf %49, %51 : vector<8x1xf32>
    %53 = arith.subf %49, %52 : vector<8x1xf32>
    %54 = math.exp %53 : vector<8x1xf32>
    %55 = vector.broadcast %52 : vector<8x1xf32> to vector<8x8xf32>
    %56 = arith.subf %47, %55 : vector<8x8xf32>
    %57 = math.exp %56 : vector<8x8xf32>
    %c1_36 = arith.constant 1 : index
    %c0_37 = arith.constant 0 : index
    %c0_38 = arith.constant 0 : index
    %58 = vector.load %arg12[%c1_36, %c0_37, %c0_38] : memref<4x8x1xf32, #tpu.memory_space<vmem>>, vector<1x8x1xf32>
    %59 = vector.shape_cast %58 : vector<1x8x1xf32> to vector<8x1xf32>
    %60 = arith.mulf %54, %59 : vector<8x1xf32>
    %cst_39 = arith.constant dense<0.000000e+00> : vector<8xf32>
    %61 = vector.multi_reduction <add>, %57, %cst_39 [1] : vector<8x8xf32> to vector<8xf32>
    %62 = vector.shape_cast %61 : vector<8xf32> to vector<8x1xf32>
    %63 = arith.addf %60, %62 : vector<8x1xf32>
    %c1_40 = arith.constant 1 : index
    %c0_41 = arith.constant 0 : index
    %c0_42 = arith.constant 0 : index
    %64 = vector.load %arg12[%c1_40, %c0_41, %c0_42] : memref<4x8x1xf32, #tpu.memory_space<vmem>>, vector<1x8x1xf32>
    %65 = vector.shape_cast %64 : vector<1x8x1xf32> to vector<8x1xf32>
    %66 = vector.shape_cast %63 : vector<8x1xf32> to vector<1x8x1xf32>
    tpu.vector_store %arg12[%c1_40, %c0_41, %c0_42], %66 {strides = array<i32>} : memref<4x8x1xf32, #tpu.memory_space<vmem>>, vector<1x8x1xf32>,
    %c1_43 = arith.constant 1 : index
    %c0_44 = arith.constant 0 : index
    %c0_45 = arith.constant 0 : index
    %67 = vector.load %arg13[%c1_43, %c0_44, %c0_45] : memref<4x8x128xf32, #tpu.memory_space<vmem>>, vector<1x8x128xf32>
    %68 = vector.shape_cast %67 : vector<1x8x128xf32> to vector<8x128xf32>
    %69 = vector.broadcast %54 : vector<8x1xf32> to vector<8x128xf32>
    %70 = arith.mulf %69, %68 : vector<8x128xf32>
    %71 = vector.extract_strided_slice %8 {offsets = [0, 128], sizes = [8, 128], strides = [1, 1]} : vector<8x512xf32> to vector<8x128xf32>
    %cst_46 = arith.constant dense<0.000000e+00> : vector<8x128xf32>
    %72 = tpu.matmul %57, %71, %cst_46 {dimension_numbers = #tpu.dot_dimension_numbers<[1], [0], [0], [1], [0, 0, 1, 1], [], []>} : vector<8x8xf32>, vector<8x128xf32>, vector<8x128xf32> -> vector<8x128xf32>
    %73 = arith.addf %70, %72 : vector<8x128xf32>
    %c1_47 = arith.constant 1 : index
    %c0_48 = arith.constant 0 : index
    %c0_49 = arith.constant 0 : index
    %74 = vector.load %arg13[%c1_47, %c0_48, %c0_49] : memref<4x8x128xf32, #tpu.memory_space<vmem>>, vector<1x8x128xf32>
    %75 = vector.shape_cast %74 : vector<1x8x128xf32> to vector<8x128xf32>
    %76 = vector.shape_cast %73 : vector<8x128xf32> to vector<1x8x128xf32>
    tpu.vector_store %arg13[%c1_47, %c0_48, %c0_49], %76 {strides = array<i32>} : memref<4x8x128xf32, #tpu.memory_space<vmem>>, vector<1x8x128xf32>,
    %c1_50 = arith.constant 1 : index
    %c0_51 = arith.constant 0 : index
    %c0_52 = arith.constant 0 : index
    %77 = vector.load %arg11[%c1_50, %c0_51, %c0_52] : memref<4x8x1xf32, #tpu.memory_space<vmem>>, vector<1x8x1xf32>
    %78 = vector.shape_cast %77 : vector<1x8x1xf32> to vector<8x1xf32>
    %79 = vector.shape_cast %52 : vector<8x1xf32> to vector<1x8x1xf32>
    tpu.vector_store %arg11[%c1_50, %c0_51, %c0_52], %79 {strides = array<i32>} : memref<4x8x1xf32, #tpu.memory_space<vmem>>, vector<1x8x1xf32>,
    %80 = vector.extract_strided_slice %9 {offsets = [0, 256], sizes = [8, 128], strides = [1, 1]} : vector<8x512xf32> to vector<8x128xf32>
    %81 = vector.extract_strided_slice %6 {offsets = [0, 256], sizes = [8, 128], strides = [1, 1]} : vector<8x512xf32> to vector<8x128xf32>
    %cst_53 = arith.constant dense<0.000000e+00> : vector<8x8xf32>
    %82 = tpu.matmul %80, %81, %cst_53 {dimension_numbers = #tpu.dot_dimension_numbers<[1], [1], [0], [0], [0, 0, 1, 0], [], []>} : vector<8x128xf32>, vector<8x128xf32>, vector<8x8xf32> -> vector<8x8xf32>
    %c2 = arith.constant 2 : index
    %c0_54 = arith.constant 0 : index
    %c0_55 = arith.constant 0 : index
    %83 = vector.load %arg11[%c2, %c0_54, %c0_55] : memref<4x8x1xf32, #tpu.memory_space<vmem>>, vector<1x8x1xf32>
    %84 = vector.shape_cast %83 : vector<1x8x1xf32> to vector<8x1xf32>
    %cst_56 = arith.constant dense<0xFF800000> : vector<8xf32>
    %85 = vector.multi_reduction <maximumf>, %82, %cst_56 [1] : vector<8x8xf32> to vector<8xf32>
    %86 = vector.shape_cast %85 : vector<8xf32> to vector<8x1xf32>
    %87 = arith.maximumf %84, %86 : vector<8x1xf32>
    %88 = arith.subf %84, %87 : vector<8x1xf32>
    %89 = math.exp %88 : vector<8x1xf32>
    %90 = vector.broadcast %87 : vector<8x1xf32> to vector<8x8xf32>
    %91 = arith.subf %82, %90 : vector<8x8xf32>
    %92 = math.exp %91 : vector<8x8xf32>
    %c2_57 = arith.constant 2 : index
    %c0_58 = arith.constant 0 : index
    %c0_59 = arith.constant 0 : index
    %93 = vector.load %arg12[%c2_57, %c0_58, %c0_59] : memref<4x8x1xf32, #tpu.memory_space<vmem>>, vector<1x8x1xf32>
    %94 = vector.shape_cast %93 : vector<1x8x1xf32> to vector<8x1xf32>
    %95 = arith.mulf %89, %94 : vector<8x1xf32>
    %cst_60 = arith.constant dense<0.000000e+00> : vector<8xf32>
    %96 = vector.multi_reduction <add>, %92, %cst_60 [1] : vector<8x8xf32> to vector<8xf32>
    %97 = vector.shape_cast %96 : vector<8xf32> to vector<8x1xf32>
    %98 = arith.addf %95, %97 : vector<8x1xf32>
    %c2_61 = arith.constant 2 : index
    %c0_62 = arith.constant 0 : index
    %c0_63 = arith.constant 0 : index
    %99 = vector.load %arg12[%c2_61, %c0_62, %c0_63] : memref<4x8x1xf32, #tpu.memory_space<vmem>>, vector<1x8x1xf32>
    %100 = vector.shape_cast %99 : vector<1x8x1xf32> to vector<8x1xf32>
    %101 = vector.shape_cast %98 : vector<8x1xf32> to vector<1x8x1xf32>
    tpu.vector_store %arg12[%c2_61, %c0_62, %c0_63], %101 {strides = array<i32>} : memref<4x8x1xf32, #tpu.memory_space<vmem>>, vector<1x8x1xf32>,
    %c2_64 = arith.constant 2 : index
    %c0_65 = arith.constant 0 : index
    %c0_66 = arith.constant 0 : index
    %102 = vector.load %arg13[%c2_64, %c0_65, %c0_66] : memref<4x8x128xf32, #tpu.memory_space<vmem>>, vector<1x8x128xf32>
    %103 = vector.shape_cast %102 : vector<1x8x128xf32> to vector<8x128xf32>
    %104 = vector.broadcast %89 : vector<8x1xf32> to vector<8x128xf32>
    %105 = arith.mulf %104, %103 : vector<8x128xf32>
    %106 = vector.extract_strided_slice %8 {offsets = [0, 256], sizes = [8, 128], strides = [1, 1]} : vector<8x512xf32> to vector<8x128xf32>
    %cst_67 = arith.constant dense<0.000000e+00> : vector<8x128xf32>
    %107 = tpu.matmul %92, %106, %cst_67 {dimension_numbers = #tpu.dot_dimension_numbers<[1], [0], [0], [1], [0, 0, 1, 1], [], []>} : vector<8x8xf32>, vector<8x128xf32>, vector<8x128xf32> -> vector<8x128xf32>
    %108 = arith.addf %105, %107 : vector<8x128xf32>
    %c2_68 = arith.constant 2 : index
    %c0_69 = arith.constant 0 : index
    %c0_70 = arith.constant 0 : index
    %109 = vector.load %arg13[%c2_68, %c0_69, %c0_70] : memref<4x8x128xf32, #tpu.memory_space<vmem>>, vector<1x8x128xf32>
    %110 = vector.shape_cast %109 : vector<1x8x128xf32> to vector<8x128xf32>
    %111 = vector.shape_cast %108 : vector<8x128xf32> to vector<1x8x128xf32>
    tpu.vector_store %arg13[%c2_68, %c0_69, %c0_70], %111 {strides = array<i32>} : memref<4x8x128xf32, #tpu.memory_space<vmem>>, vector<1x8x128xf32>,
    %c2_71 = arith.constant 2 : index
    %c0_72 = arith.constant 0 : index
    %c0_73 = arith.constant 0 : index
    %112 = vector.load %arg11[%c2_71, %c0_72, %c0_73] : memref<4x8x1xf32, #tpu.memory_space<vmem>>, vector<1x8x1xf32>
    %113 = vector.shape_cast %112 : vector<1x8x1xf32> to vector<8x1xf32>
    %114 = vector.shape_cast %87 : vector<8x1xf32> to vector<1x8x1xf32>
    tpu.vector_store %arg11[%c2_71, %c0_72, %c0_73], %114 {strides = array<i32>} : memref<4x8x1xf32, #tpu.memory_space<vmem>>, vector<1x8x1xf32>,
    %115 = vector.extract_strided_slice %9 {offsets = [0, 384], sizes = [8, 128], strides = [1, 1]} : vector<8x512xf32> to vector<8x128xf32>
    %116 = vector.extract_strided_slice %6 {offsets = [0, 384], sizes = [8, 128], strides = [1, 1]} : vector<8x512xf32> to vector<8x128xf32>
    %cst_74 = arith.constant dense<0.000000e+00> : vector<8x8xf32>
    %117 = tpu.matmul %115, %116, %cst_74 {dimension_numbers = #tpu.dot_dimension_numbers<[1], [1], [0], [0], [0, 0, 1, 0], [], []>} : vector<8x128xf32>, vector<8x128xf32>, vector<8x8xf32> -> vector<8x8xf32>
    %c3 = arith.constant 3 : index
    %c0_75 = arith.constant 0 : index
    %c0_76 = arith.constant 0 : index
    %118 = vector.load %arg11[%c3, %c0_75, %c0_76] : memref<4x8x1xf32, #tpu.memory_space<vmem>>, vector<1x8x1xf32>
    %119 = vector.shape_cast %118 : vector<1x8x1xf32> to vector<8x1xf32>
    %cst_77 = arith.constant dense<0xFF800000> : vector<8xf32>
    %120 = vector.multi_reduction <maximumf>, %117, %cst_77 [1] : vector<8x8xf32> to vector<8xf32>
    %121 = vector.shape_cast %120 : vector<8xf32> to vector<8x1xf32>
    %122 = arith.maximumf %119, %121 : vector<8x1xf32>
    %123 = arith.subf %119, %122 : vector<8x1xf32>
    %124 = math.exp %123 : vector<8x1xf32>
    %125 = vector.broadcast %122 : vector<8x1xf32> to vector<8x8xf32>
    %126 = arith.subf %117, %125 : vector<8x8xf32>
    %127 = math.exp %126 : vector<8x8xf32>
    %c3_78 = arith.constant 3 : index
    %c0_79 = arith.constant 0 : index
    %c0_80 = arith.constant 0 : index
    %128 = vector.load %arg12[%c3_78, %c0_79, %c0_80] : memref<4x8x1xf32, #tpu.memory_space<vmem>>, vector<1x8x1xf32>
    %129 = vector.shape_cast %128 : vector<1x8x1xf32> to vector<8x1xf32>
    %130 = arith.mulf %124, %129 : vector<8x1xf32>
    %cst_81 = arith.constant dense<0.000000e+00> : vector<8xf32>
    %131 = vector.multi_reduction <add>, %127, %cst_81 [1] : vector<8x8xf32> to vector<8xf32>
    %132 = vector.shape_cast %131 : vector<8xf32> to vector<8x1xf32>
    %133 = arith.addf %130, %132 : vector<8x1xf32>
    %c3_82 = arith.constant 3 : index
    %c0_83 = arith.constant 0 : index
    %c0_84 = arith.constant 0 : index
    %134 = vector.load %arg12[%c3_82, %c0_83, %c0_84] : memref<4x8x1xf32, #tpu.memory_space<vmem>>, vector<1x8x1xf32>
    %135 = vector.shape_cast %134 : vector<1x8x1xf32> to vector<8x1xf32>
    %136 = vector.shape_cast %133 : vector<8x1xf32> to vector<1x8x1xf32>
    tpu.vector_store %arg12[%c3_82, %c0_83, %c0_84], %136 {strides = array<i32>} : memref<4x8x1xf32, #tpu.memory_space<vmem>>, vector<1x8x1xf32>,
    %c3_85 = arith.constant 3 : index
    %c0_86 = arith.constant 0 : index
    %c0_87 = arith.constant 0 : index
    %137 = vector.load %arg13[%c3_85, %c0_86, %c0_87] : memref<4x8x128xf32, #tpu.memory_space<vmem>>, vector<1x8x128xf32>
    %138 = vector.shape_cast %137 : vector<1x8x128xf32> to vector<8x128xf32>
    %139 = vector.broadcast %124 : vector<8x1xf32> to vector<8x128xf32>
    %140 = arith.mulf %139, %138 : vector<8x128xf32>
    %141 = vector.extract_strided_slice %8 {offsets = [0, 384], sizes = [8, 128], strides = [1, 1]} : vector<8x512xf32> to vector<8x128xf32>
    %cst_88 = arith.constant dense<0.000000e+00> : vector<8x128xf32>
    %142 = tpu.matmul %127, %141, %cst_88 {dimension_numbers = #tpu.dot_dimension_numbers<[1], [0], [0], [1], [0, 0, 1, 1], [], []>} : vector<8x8xf32>, vector<8x128xf32>, vector<8x128xf32> -> vector<8x128xf32>
    %143 = arith.addf %140, %142 : vector<8x128xf32>
    %c3_89 = arith.constant 3 : index
    %c0_90 = arith.constant 0 : index
    %c0_91 = arith.constant 0 : index
    %144 = vector.load %arg13[%c3_89, %c0_90, %c0_91] : memref<4x8x128xf32, #tpu.memory_space<vmem>>, vector<1x8x128xf32>
    %145 = vector.shape_cast %144 : vector<1x8x128xf32> to vector<8x128xf32>
    %146 = vector.shape_cast %143 : vector<8x128xf32> to vector<1x8x128xf32>
    tpu.vector_store %arg13[%c3_89, %c0_90, %c0_91], %146 {strides = array<i32>} : memref<4x8x128xf32, #tpu.memory_space<vmem>>, vector<1x8x128xf32>,
    %c3_92 = arith.constant 3 : index
    %c0_93 = arith.constant 0 : index
    %c0_94 = arith.constant 0 : index
    %147 = vector.load %arg11[%c3_92, %c0_93, %c0_94] : memref<4x8x1xf32, #tpu.memory_space<vmem>>, vector<1x8x1xf32>
    %148 = vector.shape_cast %147 : vector<1x8x1xf32> to vector<8x1xf32>
    %149 = vector.shape_cast %122 : vector<8x1xf32> to vector<1x8x1xf32>
    tpu.vector_store %arg11[%c3_92, %c0_93, %c0_94], %149 {strides = array<i32>} : memref<4x8x1xf32, #tpu.memory_space<vmem>>, vector<1x8x1xf32>,
    %c0_i32_95 = arith.constant 0 : i32
    %150 = arith.cmpi eq, %arg2, %c0_i32_95 : i32
    %151 = arith.extui %150 : i1 to i32
    %c0_i32_96 = arith.constant 0 : i32
    %152 = arith.cmpi ne, %151, %c0_i32_96 : i32
    scf.if %152 {
      %c0_97 = arith.constant 0 : index
      %c0_98 = arith.constant 0 : index
      %153 = vector.load %arg7[%c0_97, %c0_98] : memref<512x128xf32, #tpu.memory_space<vmem>>, vector<512x128xf32>
      %cst_99 = arith.constant 0.000000e+00 : f32
      %154 = vector.broadcast %cst_99 : f32 to vector<8x128xf32>
      %c0_100 = arith.constant 0 : index
      %c0_101 = arith.constant 0 : index
      %155 = vector.load %arg8[%c0_100, %c0_101] : memref<1x128xf32, #tpu.memory_space<vmem>>, vector<1x128xf32>
      %156 = vector.broadcast %155 : vector<1x128xf32> to vector<8x128xf32>
      %157 = arith.addf %154, %156 : vector<8x128xf32>
      %c0_102 = arith.constant 0 : index
      %c0_103 = arith.constant 0 : index
      %c0_104 = arith.constant 0 : index
      %158 = vector.load %arg13[%c0_102, %c0_103, %c0_104] : memref<4x8x128xf32, #tpu.memory_space<vmem>>, vector<1x8x128xf32>
      %159 = vector.shape_cast %158 : vector<1x8x128xf32> to vector<8x128xf32>
      %c0_105 = arith.constant 0 : index
      %c0_106 = arith.constant 0 : index
      %c0_107 = arith.constant 0 : index
      %160 = vector.load %arg12[%c0_105, %c0_106, %c0_107] : memref<4x8x1xf32, #tpu.memory_space<vmem>>, vector<1x8x1xf32>
      %161 = vector.shape_cast %160 : vector<1x8x1xf32> to vector<8x1xf32>
      %162 = tpu.reciprocal %161 {approx = true} : vector<8x1xf32> -> vector<8x1xf32>
      %163 = vector.broadcast %162 : vector<8x1xf32> to vector<8x128xf32>
      %164 = arith.mulf %159, %163 : vector<8x128xf32>
      %165 = vector.extract_strided_slice %153 {offsets = [0, 0], sizes = [128, 128], strides = [1, 1]} : vector<512x128xf32> to vector<128x128xf32>
      %cst_108 = arith.constant dense<0.000000e+00> : vector<8x128xf32>
      %166 = tpu.matmul %164, %165, %cst_108 {dimension_numbers = #tpu.dot_dimension_numbers<[1], [0], [0], [1], [0, 0, 1, 1], [], []>} : vector<8x128xf32>, vector<128x128xf32>, vector<8x128xf32> -> vector<8x128xf32>
      %167 = arith.addf %157, %166 : vector<8x128xf32>
      %c1_109 = arith.constant 1 : index
      %c0_110 = arith.constant 0 : index
      %c0_111 = arith.constant 0 : index
      %168 = vector.load %arg13[%c1_109, %c0_110, %c0_111] : memref<4x8x128xf32, #tpu.memory_space<vmem>>, vector<1x8x128xf32>
      %169 = vector.shape_cast %168 : vector<1x8x128xf32> to vector<8x128xf32>
      %c1_112 = arith.constant 1 : index
      %c0_113 = arith.constant 0 : index
      %c0_114 = arith.constant 0 : index
      %170 = vector.load %arg12[%c1_112, %c0_113, %c0_114] : memref<4x8x1xf32, #tpu.memory_space<vmem>>, vector<1x8x1xf32>
      %171 = vector.shape_cast %170 : vector<1x8x1xf32> to vector<8x1xf32>
      %172 = tpu.reciprocal %171 {approx = true} : vector<8x1xf32> -> vector<8x1xf32>
      %173 = vector.broadcast %172 : vector<8x1xf32> to vector<8x128xf32>
      %174 = arith.mulf %169, %173 : vector<8x128xf32>
      %175 = vector.extract_strided_slice %153 {offsets = [128, 0], sizes = [128, 128], strides = [1, 1]} : vector<512x128xf32> to vector<128x128xf32>
      %cst_115 = arith.constant dense<0.000000e+00> : vector<8x128xf32>
      %176 = tpu.matmul %174, %175, %cst_115 {dimension_numbers = #tpu.dot_dimension_numbers<[1], [0], [0], [1], [0, 0, 1, 1], [], []>} : vector<8x128xf32>, vector<128x128xf32>, vector<8x128xf32> -> vector<8x128xf32>
      %177 = arith.addf %167, %176 : vector<8x128xf32>
      %c2_116 = arith.constant 2 : index
      %c0_117 = arith.constant 0 : index
      %c0_118 = arith.constant 0 : index
      %178 = vector.load %arg13[%c2_116, %c0_117, %c0_118] : memref<4x8x128xf32, #tpu.memory_space<vmem>>, vector<1x8x128xf32>
      %179 = vector.shape_cast %178 : vector<1x8x128xf32> to vector<8x128xf32>
      %c2_119 = arith.constant 2 : index
      %c0_120 = arith.constant 0 : index
      %c0_121 = arith.constant 0 : index
      %180 = vector.load %arg12[%c2_119, %c0_120, %c0_121] : memref<4x8x1xf32, #tpu.memory_space<vmem>>, vector<1x8x1xf32>
      %181 = vector.shape_cast %180 : vector<1x8x1xf32> to vector<8x1xf32>
      %182 = tpu.reciprocal %181 {approx = true} : vector<8x1xf32> -> vector<8x1xf32>
      %183 = vector.broadcast %182 : vector<8x1xf32> to vector<8x128xf32>
      %184 = arith.mulf %179, %183 : vector<8x128xf32>
      %185 = vector.extract_strided_slice %153 {offsets = [256, 0], sizes = [128, 128], strides = [1, 1]} : vector<512x128xf32> to vector<128x128xf32>
      %cst_122 = arith.constant dense<0.000000e+00> : vector<8x128xf32>
      %186 = tpu.matmul %184, %185, %cst_122 {dimension_numbers = #tpu.dot_dimension_numbers<[1], [0], [0], [1], [0, 0, 1, 1], [], []>} : vector<8x128xf32>, vector<128x128xf32>, vector<8x128xf32> -> vector<8x128xf32>
      %187 = arith.addf %177, %186 : vector<8x128xf32>
      %c3_123 = arith.constant 3 : index
      %c0_124 = arith.constant 0 : index
      %c0_125 = arith.constant 0 : index
      %188 = vector.load %arg13[%c3_123, %c0_124, %c0_125] : memref<4x8x128xf32, #tpu.memory_space<vmem>>, vector<1x8x128xf32>
      %189 = vector.shape_cast %188 : vector<1x8x128xf32> to vector<8x128xf32>
      %c3_126 = arith.constant 3 : index
      %c0_127 = arith.constant 0 : index
      %c0_128 = arith.constant 0 : index
      %190 = vector.load %arg12[%c3_126, %c0_127, %c0_128] : memref<4x8x1xf32, #tpu.memory_space<vmem>>, vector<1x8x1xf32>
      %191 = vector.shape_cast %190 : vector<1x8x1xf32> to vector<8x1xf32>
      %192 = tpu.reciprocal %191 {approx = true} : vector<8x1xf32> -> vector<8x1xf32>
      %193 = vector.broadcast %192 : vector<8x1xf32> to vector<8x128xf32>
      %194 = arith.mulf %189, %193 : vector<8x128xf32>
      %195 = vector.extract_strided_slice %153 {offsets = [384, 0], sizes = [128, 128], strides = [1, 1]} : vector<512x128xf32> to vector<128x128xf32>
      %cst_129 = arith.constant dense<0.000000e+00> : vector<8x128xf32>
      %196 = tpu.matmul %194, %195, %cst_129 {dimension_numbers = #tpu.dot_dimension_numbers<[1], [0], [0], [1], [0, 0, 1, 1], [], []>} : vector<8x128xf32>, vector<128x128xf32>, vector<8x128xf32> -> vector<8x128xf32>
      %197 = arith.addf %187, %196 : vector<8x128xf32>
      %c0_130 = arith.constant 0 : index
      %c0_131 = arith.constant 0 : index
      %c0_132 = arith.constant 0 : index
      %198 = vector.load %arg9[%c0_130, %c0_131, %c0_132] : memref<1x8x128xf32, #tpu.memory_space<vmem>>, vector<1x8x128xf32>
      %199 = vector.shape_cast %198 : vector<1x8x128xf32> to vector<8x128xf32>
      %200 = vector.shape_cast %197 : vector<8x128xf32> to vector<1x8x128xf32>
      tpu.vector_store %arg9[%c0_130, %c0_131, %c0_132], %200 {strides = array<i32>} : memref<1x8x128xf32, #tpu.memory_space<vmem>>, vector<1x8x128xf32>,
    } else {
    }
    return
  }
  func.func @transform_0(%arg0: i32, %arg1: i32, %arg2: i32) -> (i32, i32, i32) {
    %c0_i32 = arith.constant 0 : i32
    %c0_i32_0 = arith.constant 0 : i32
    %c0_i32_1 = arith.constant 0 : i32
    return %arg0, %c0_i32, %c0_i32_0 : i32, i32, i32
  }
  func.func @transform_1(%arg0: i32, %arg1: i32, %arg2: i32) -> (i32, i32) {
    %c0_i32 = arith.constant 0 : i32
    %c0_i32_0 = arith.constant 0 : i32
    %c0_i32_1 = arith.constant 0 : i32
    return %c0_i32, %c0_i32_0 : i32, i32
  }
  func.func @transform_2(%arg0: i32, %arg1: i32, %arg2: i32) -> (i32, i32) {
    %c0_i32 = arith.constant 0 : i32
    %c0_i32_0 = arith.constant 0 : i32
    %c0_i32_1 = arith.constant 0 : i32
    return %c0_i32, %c0_i32_0 : i32, i32
  }
  func.func @transform_3(%arg0: i32, %arg1: i32, %arg2: i32) -> (i32, i32) {
    %c0_i32 = arith.constant 0 : i32
    %c0_i32_0 = arith.constant 0 : i32
    %c0_i32_1 = arith.constant 0 : i32
    return %c0_i32, %c0_i32_0 : i32, i32
  }
  func.func @transform_4(%arg0: i32, %arg1: i32, %arg2: i32) -> (i32, i32) {
    %c0_i32 = arith.constant 0 : i32
    %c0_i32_0 = arith.constant 0 : i32
    %c0_i32_1 = arith.constant 0 : i32
    return %c0_i32, %c0_i32_0 : i32, i32
  }
  func.func @transform_5(%arg0: i32, %arg1: i32, %arg2: i32) -> (i32, i32) {
    %c0_i32 = arith.constant 0 : i32
    %c0_i32_0 = arith.constant 0 : i32
    %c0_i32_1 = arith.constant 0 : i32
    return %c0_i32, %c0_i32_0 : i32, i32
  }
  func.func @transform_6(%arg0: i32, %arg1: i32, %arg2: i32) -> (i32, i32, i32) {
    %c0_i32 = arith.constant 0 : i32
    %c0_i32_0 = arith.constant 0 : i32
    return %arg0, %arg1, %c0_i32 : i32, i32, i32
  }
}

</mosaic_0001>

<llo_original>
// kernel: _lambda_.1
$region0: #{_lambda_.1}
  #allocation0 [shape = 'u32[]', space=smem, size = 0x4, offset = 0x4, fixed_abs, tag = 'smem constant byte address 0x4 - core index']
  #allocation1 [shape = 'u32[144,128]{1,0:T(1,128)}', space=vmem, size = 0x12000, scoped, tag = 'internal scratch']
  #allocation2 [shape = 'f32[8,512]{1,0:T(8,128)}', space=vmem, size = 0x4000, scoped, tag = 'scratch operand']
  #allocation3 [shape = 'f32[4,8,1]{2,1,0:T(8,128)}', space=vmem, size = 0x4000, scoped, tag = 'scratch operand']
  #allocation4 [shape = 'f32[4,8,1]{2,1,0:T(8,128)}', space=vmem, size = 0x4000, scoped, tag = 'scratch operand']
  #allocation5 [shape = 'f32[4,8,128]{2,1,0:T(8,128)}', space=vmem, size = 0x4000, scoped, tag = 'scratch operand']
  %s0 = inlined_call_operand.hbm [shape: f32[2,8,128], index: 0, kind: input, shape index: {}]
  %s1 = inlined_call_operand.hbm [shape: f32[128,512], index: 1, kind: input, shape index: {}]
  %s2 = inlined_call_operand.hbm [shape: f32[128,512], index: 2, kind: input, shape index: {}]
  %s3 = inlined_call_operand.hbm [shape: f32[128,512], index: 3, kind: input, shape index: {}]
  %s4 = inlined_call_operand.hbm [shape: f32[512,128], index: 4, kind: input, shape index: {}]
  %s5 = inlined_call_operand.hbm [shape: f32[1,128], index: 5, kind: input, shape index: {}]
  %s6 = inlined_call_operand.hbm [shape: f32[2,8,128], index: 6, kind: output, shape index: {}]
  %s7 = sld [smem:[#allocation0]]
  $region89: #{_lambda_.1} parent=0
    _
  %s9 = ssub.s32 1, %s7
  %s10 = scalar_select 0, %s9, %s7
  $region1: #{_lambda_.1} parent=0
    #allocation6 [shape = 'u8[8192]{0}', space=vmem, size = 0x2000, scoped, tag = 'input window, operand 0']
    #allocation7 [shape = 's32[2]{0}', space=sflag, size = 0x8, scoped, tag = 'scoped memory for _lambda_.1']
    #allocation8 [shape = 's32[2]{0}', space=sflag, size = 0x8, scoped, tag = 'scoped memory for _lambda_.1']
    #allocation9 [shape = 'u8[262144]{0}', space=vmem, size = 0x40000, scoped, tag = 'input window, operand 1, single buffered']
    #allocation10 [shape = 's32[1]{0}', space=sflag, size = 0x4, scoped, tag = 'scoped memory for _lambda_.1']
    #allocation11 [shape = 'u8[262144]{0}', space=vmem, size = 0x40000, scoped, tag = 'input window, operand 2, single buffered']
    #allocation12 [shape = 'u8[262144]{0}', space=vmem, size = 0x40000, scoped, tag = 'input window, operand 3, single buffered']
    #allocation13 [shape = 's32[1]{0}', space=sflag, size = 0x4, scoped, tag = 'scoped memory for _lambda_.1']
    #allocation14 [shape = 'u8[262144]{0}', space=vmem, size = 0x40000, scoped, tag = 'input window, operand 4, single buffered']
    #allocation15 [shape = 'u8[512]{0}', space=vmem, size = 0x400, scoped, tag = 'input window, operand 5, single buffered']
    #allocation16 [shape = 's32[1]{0}', space=sflag, size = 0x4, scoped, tag = 'scoped memory for _lambda_.1']
    #allocation17 [shape = 'u8[8192]{0}', space=vmem, size = 0x2000, scoped, tag = 'output window, operand 0']
    %11 = vsyncpa [#allocation7], 0
    %s12 = scalar_lea.sflag [#allocation7], 1
    %13 = vsyncpa %s12, 0
    %14 = vsyncpa [#allocation10], 0
    %15 = vsyncpa [#allocation13], 0
    %16 = vsyncpa [#allocation16], 0
    %17 = vsyncpa [#allocation8], 0
    %s18 = scalar_lea.sflag [#allocation8], 1
    %19 = vsyncpa %s18, 0
    loop: start=0, step=1, limit=4
    $region2: #{_lambda_.1} parent=1 // loop_pre_header
      _
    $region3: #{_lambda_.1} parent=1 // loop_header
      %s21 = sphi 0, %s25
      %p22 = scmp.ge.s32.totalorder %s21, 4
      %s28 = sphi 0, %s47
      %s29 = sphi 0, %s43
      %s30 = sphi 0, %s39
      %s31 = sphi 0, %s28
      %s32 = sphi 0, %s29
      %s33 = sphi 0, %s30
      %s34 = sphi 0, %s31
      %s35 = sphi 0, %s32
      %s36 = sphi 0, %s33
      %s50 = sphi 0, %s52
      %s53 = sphi 0, %s50
      %s54 = sphi 0, %s53
      %s70 = sphi 0, %s54
      %s74 = sphi 0, %s74
      %s76 = sphi 0, %s74
      %s77 = sphi 0, %s76
      %s91 = sphi 0, %s77
      %s95 = sphi 0, %s95
      %s97 = sphi 0, %s95
      %s98 = sphi 0, %s97
      %s112 = sphi 0, %s98
      %s116 = sphi 0, %s116
      %s118 = sphi 0, %s116
      %s119 = sphi 0, %s118
      %s133 = sphi 0, %s119
      %s137 = sphi 0, %s137
      %s139 = sphi 0, %s137
      %s140 = sphi 0, %s139
      %s154 = sphi 0, %s140
      %s158 = sphi 0, %s158
      %s160 = sphi 0, %s158
      %s161 = sphi 0, %s160
      %s175 = sphi 0, %s161
      %s183 = sphi 0, %s185
      %s186 = sphi 0, %s183
      %s187 = sphi 0, %s186
      %s203 = sphi 0, %s187
    $region4: #{_lambda_.1} parent=1 // loop_header_branch
      %24 = sbr.rel (%p22) target = $region8
    $region5: #{_lambda_.1} parent=1 // loop_body
      %s26 = ssub.s32 %s21, 1
      %s27 = ssub.s32 %s21, 2
      %s37 = sadd.s32 1, %s30
      %p38 = scmp.ge.s32.totalorder %s37, 1
      %s39 = scalar_select %p38, 0, %s37
      %s40 = sadd.s32 1, %s29
      %s41 = scalar_select %p38, %s40, %s29
      %p42 = scmp.ge.s32.totalorder %s41, 1
      %s43 = scalar_select %p42, 0, %s41
      %s44 = sadd.s32 1, %s28
      %s45 = scalar_select %p42, %s44, %s28
      %p46 = scmp.ge.s32.totalorder %s45, 2
      %s47 = scalar_select %p46, 0, %s45
      %s48 = ssub.s32 %s28, %s47
      %p49 = scmp.eq.s32.totalorder %s48, 0
      %s51 = sadd.s32 %s50, 1
      %s52 = scalar_select %p49, %s50, %s51
      %p55 = pneg %p49
      %p56 = scmp.eq.s32.totalorder %s21, 1
      %p57 = por %p55, %p56
      %p58 = scmp.ne.s32.totalorder %s50, %s53
      %p59 = scmp.eq.s32.totalorder %s21, 0
      %p60 = por %p58, %p59
      %p61 = scmp.ne.s32.totalorder %s50, %s53
      %p62 = scmp.eq.s32.totalorder %s26, 1
      %p63 = por %p61, %p62
      %p64 = scmp.ne.s32.totalorder %s53, %s54
      %p65 = scmp.eq.s32.totalorder %s26, 0
      %p66 = por %p64, %p65
      %p67 = scmp.ne.s32.totalorder %s53, %s54
      %p68 = scmp.eq.s32.totalorder %s27, 1
      %p69 = por %p67, %p68
      %p71 = scmp.ne.s32.totalorder %s54, %s70
      %p72 = scmp.eq.s32.totalorder %s27, 0
      %p73 = por %p71, %p72
      %s75 = sadd.s32 %s74, 1
      %p78 = scmp.eq.s32.totalorder %s21, 1
      %p79 = scmp.ne.s32.totalorder %s74, %s76
      %p80 = scmp.eq.s32.totalorder %s21, 0
      %p81 = por %p79, %p80
      %p82 = scmp.ne.s32.totalorder %s74, %s76
      %p83 = scmp.eq.s32.totalorder %s26, 1
      %p84 = por %p82, %p83
      %p85 = scmp.ne.s32.totalorder %s76, %s77
      %p86 = scmp.eq.s32.totalorder %s26, 0
      %p87 = por %p85, %p86
      %p88 = scmp.ne.s32.totalorder %s76, %s77
      %p89 = scmp.eq.s32.totalorder %s27, 1
      %p90 = por %p88, %p89
      %p92 = scmp.ne.s32.totalorder %s77, %s91
      %p93 = scmp.eq.s32.totalorder %s27, 0
      %p94 = por %p92, %p93
      %s96 = sadd.s32 %s95, 1
      %p99 = scmp.eq.s32.totalorder %s21, 1
      %p100 = scmp.ne.s32.totalorder %s95, %s97
      %p101 = scmp.eq.s32.totalorder %s21, 0
      %p102 = por %p100, %p101
      %p103 = scmp.ne.s32.totalorder %s95, %s97
      %p104 = scmp.eq.s32.totalorder %s26, 1
      %p105 = por %p103, %p104
      %p106 = scmp.ne.s32.totalorder %s97, %s98
      %p107 = scmp.eq.s32.totalorder %s26, 0
      %p108 = por %p106, %p107
      %p109 = scmp.ne.s32.totalorder %s97, %s98
      %p110 = scmp.eq.s32.totalorder %s27, 1
      %p111 = por %p109, %p110
      %p113 = scmp.ne.s32.totalorder %s98, %s112
      %p114 = scmp.eq.s32.totalorder %s27, 0
      %p115 = por %p113, %p114
      %s117 = sadd.s32 %s116, 1
      %p120 = scmp.eq.s32.totalorder %s21, 1
      %p121 = scmp.ne.s32.totalorder %s116, %s118
      %p122 = scmp.eq.s32.totalorder %s21, 0
      %p123 = por %p121, %p122
      %p124 = scmp.ne.s32.totalorder %s116, %s118
      %p125 = scmp.eq.s32.totalorder %s26, 1
      %p126 = por %p124, %p125
      %p127 = scmp.ne.s32.totalorder %s118, %s119
      %p128 = scmp.eq.s32.totalorder %s26, 0
      %p129 = por %p127, %p128
      %p130 = scmp.ne.s32.totalorder %s118, %s119
      %p131 = scmp.eq.s32.totalorder %s27, 1
      %p132 = por %p130, %p131
      %p134 = scmp.ne.s32.totalorder %s119, %s133
      %p135 = scmp.eq.s32.totalorder %s27, 0
      %p136 = por %p134, %p135
      %s138 = sadd.s32 %s137, 1
      %p141 = scmp.eq.s32.totalorder %s21, 1
      %p142 = scmp.ne.s32.totalorder %s137, %s139
      %p143 = scmp.eq.s32.totalorder %s21, 0
      %p144 = por %p142, %p143
      %p145 = scmp.ne.s32.totalorder %s137, %s139
      %p146 = scmp.eq.s32.totalorder %s26, 1
      %p147 = por %p145, %p146
      %p148 = scmp.ne.s32.totalorder %s139, %s140
      %p149 = scmp.eq.s32.totalorder %s26, 0
      %p150 = por %p148, %p149
      %p151 = scmp.ne.s32.totalorder %s139, %s140
      %p152 = scmp.eq.s32.totalorder %s27, 1
      %p153 = por %p151, %p152
      %p155 = scmp.ne.s32.totalorder %s140, %s154
      %p156 = scmp.eq.s32.totalorder %s27, 0
      %p157 = por %p155, %p156
      %s159 = sadd.s32 %s158, 1
      %p162 = scmp.eq.s32.totalorder %s21, 1
      %p163 = scmp.ne.s32.totalorder %s158, %s160
      %p164 = scmp.eq.s32.totalorder %s21, 0
      %p165 = por %p163, %p164
      %p166 = scmp.ne.s32.totalorder %s158, %s160
      %p167 = scmp.eq.s32.totalorder %s26, 1
      %p168 = por %p166, %p167
      %p169 = scmp.ne.s32.totalorder %s160, %s161
      %p170 = scmp.eq.s32.totalorder %s26, 0
      %p171 = por %p169, %p170
      %p172 = scmp.ne.s32.totalorder %s160, %s161
      %p173 = scmp.eq.s32.totalorder %s27, 1
      %p174 = por %p172, %p173
      %p176 = scmp.ne.s32.totalorder %s161, %s175
      %p177 = scmp.eq.s32.totalorder %s27, 0
      %p178 = por %p176, %p177
      %s179 = ssub.s32 %s28, %s47
      %s180 = ssub.s32 %s29, %s43
      %s181 = sor.u32 %s179, %s180
      %p182 = scmp.eq.s32.totalorder %s181, 0
      %s184 = sadd.s32 %s183, 1
      %s185 = scalar_select %p182, %s183, %s184
      %p188 = pneg %p182
      %p189 = scmp.eq.s32.totalorder %s21, 1
      %p190 = por %p188, %p189
      %p191 = scmp.ne.s32.totalorder %s183, %s186
      %p192 = scmp.eq.s32.totalorder %s21, 0
      %p193 = por %p191, %p192
      %p194 = scmp.ne.s32.totalorder %s183, %s186
      %p195 = scmp.eq.s32.totalorder %s26, 1
      %p196 = por %p194, %p195
      %p197 = scmp.ne.s32.totalorder %s186, %s187
      %p198 = scmp.eq.s32.totalorder %s26, 0
      %p199 = por %p197, %p198
      %p200 = scmp.ne.s32.totalorder %s186, %s187
      %p201 = scmp.eq.s32.totalorder %s27, 1
      %p202 = por %p200, %p201
      %p204 = scmp.ne.s32.totalorder %s187, %s203
      %p205 = scmp.eq.s32.totalorder %s27, 0
      %p206 = por %p204, %p205
      %p207 = scmp.le.s32.totalorder 1, %s21
      %p208 = scmp.lt.s32.totalorder %s21, 3
      %p209 = pnand %p207, %p208
      %p210 = pneg %p209
      // Predicated region
      $region9: #{_lambda_.1} parent=5 // pred_check
        _
      $region10: #{_lambda_.1} parent=5 // pred_check_branch
        %212 = sbr.rel (%p209) target = $region12
      $region11: #{_lambda_.1} parent=5 // pred_region
        %s213 = ssub.s32 %s21, 1
        // Predicated region
        $region13: #{_lambda_.1} parent=11 // pred_check
          %p214 = pneg %p87
        $region14: #{_lambda_.1} parent=11 // pred_check_branch
          %216 = sbr.rel (%p214) target = $region16
        $region15: #{_lambda_.1} parent=11 // pred_region
          %s218 = ssub.s32 8192, 8192
          %219 = vsyncadd [#allocation10], %s218
          %s220 = sshll.u32 [#allocation9], 4
          %s221 = int_to_ptr.vmem [resolvable:$true] %s220
          %226 = dma.hbm_to_vmem [thread:$0]  %s1, 8192, %s221, [#allocation10], 512, 512, 32
        $region16: #{_lambda_.1} parent=11 // pred_fallthru
          _
        // Predicated region
        $region17: #{_lambda_.1} parent=11 // pred_check
          %p227 = pneg %p108
        $region18: #{_lambda_.1} parent=11 // pred_check_branch
          %229 = sbr.rel (%p227) target = $region20
        $region19: #{_lambda_.1} parent=11 // pred_region
          %s231 = ssub.s32 8192, 8192
          %232 = vsyncadd [#allocation10], %s231
          %s233 = sshll.u32 [#allocation11], 4
          %s234 = int_to_ptr.vmem [resolvable:$true] %s233
          %239 = dma.hbm_to_vmem [thread:$0]  %s2, 8192, %s234, [#allocation10], 512, 512, 32
        $region20: #{_lambda_.1} parent=11 // pred_fallthru
          _
        // Predicated region
        $region21: #{_lambda_.1} parent=11 // pred_check
          %p240 = pneg %p129
        $region22: #{_lambda_.1} parent=11 // pred_check_branch
          %242 = sbr.rel (%p240) target = $region24
        $region23: #{_lambda_.1} parent=11 // pred_region
          %s244 = ssub.s32 8192, 8192
          %245 = vsyncadd [#allocation13], %s244
          %s246 = sshll.u32 [#allocation12], 4
          %s247 = int_to_ptr.vmem [resolvable:$true] %s246
          %252 = dma.hbm_to_vmem [thread:$0]  %s3, 8192, %s247, [#allocation13], 512, 512, 32
        $region24: #{_lambda_.1} parent=11 // pred_fallthru
          _
        // Predicated region
        $region25: #{_lambda_.1} parent=11 // pred_check
          %p253 = pneg %p150
        $region26: #{_lambda_.1} parent=11 // pred_check_branch
          %255 = sbr.rel (%p253) target = $region28
        $region27: #{_lambda_.1} parent=11 // pred_region
          %s257 = ssub.s32 8192, 8192
          %258 = vsyncadd [#allocation13], %s257
          %s259 = sshll.u32 [#allocation14], 4
          %s260 = int_to_ptr.vmem [resolvable:$true] %s259
          %265 = dma.hbm_to_vmem [thread:$0]  %s4, 8192, %s260, [#allocation13], 128, 128, 8
        $region28: #{_lambda_.1} parent=11 // pred_fallthru
          _
        // Predicated region
        $region29: #{_lambda_.1} parent=11 // pred_check
          %p266 = pneg %p171
        $region30: #{_lambda_.1} parent=11 // pred_check_branch
          %268 = sbr.rel (%p266) target = $region32
        $region31: #{_lambda_.1} parent=11 // pred_region
          %s270 = ssub.s32 16, 16
          %271 = vsyncadd [#allocation16], %s270
          %s273 = sshll.u32 [#allocation15], 4
          %s274 = int_to_ptr.vmem [resolvable:$true] %s273
          %276 = dma.hbm_to_vmem [thread:$0]  %s5, 16, %s274, [#allocation16]
        $region32: #{_lambda_.1} parent=11 // pred_fallthru
          _
      $region12: #{_lambda_.1} parent=5 // pred_fallthru
        _
      %p277 = scmp.lt.s32.totalorder %s21, 2
      // Predicated region
      $region33: #{_lambda_.1} parent=5 // pred_check
        %p278 = pneg %p277
      $region34: #{_lambda_.1} parent=5 // pred_check_branch
        %280 = sbr.rel (%p278) target = $region36
      $region35: #{_lambda_.1} parent=5 // pred_region
        // Predicated region
        $region37: #{_lambda_.1} parent=35 // pred_check
          %p281 = pneg %p60
        $region38: #{_lambda_.1} parent=35 // pred_check_branch
          %283 = sbr.rel (%p281) target = $region40
        $region39: #{_lambda_.1} parent=35 // pred_region
          %s284 = sand.u32 %s50, 1
          %s285 = scalar_lea.sflag [#allocation7], %s284
          %s286 = sand.u32 %s50, 1
          %s287 = smul.addr %s286, 8
          %s288 = scalar_lea.vmem [#allocation6], %s287
          %s290 = ssub.s32 128, 128
          %291 = vsyncadd %s285, %s290
          %s292 = smul.addr %s28, 128
          %s293 = scalar_lea.hbm %s0, %s292
          %s295 = sshll.u32 %s288, 4
          %s296 = int_to_ptr.vmem [resolvable:$true] %s295
          %298 = dma.hbm_to_vmem [thread:$0]  %s293, 128, %s296, %s285
        $region40: #{_lambda_.1} parent=35 // pred_fallthru
          _
      $region36: #{_lambda_.1} parent=5 // pred_fallthru
        _
      %p299 = scmp.le.s32.totalorder 1, %s21
      %p300 = scmp.lt.s32.totalorder %s21, 3
      %p301 = pnand %p299, %p300
      %p302 = pneg %p301
      // Predicated region
      $region41: #{_lambda_.1} parent=5 // pred_check
        _
      $region42: #{_lambda_.1} parent=5 // pred_check_branch
        %304 = sbr.rel (%p301) target = $region44
      $region43: #{_lambda_.1} parent=5 // pred_region
        %s305 = ssub.s32 %s21, 1
        %s306 = sand.u32 %s53, 1
        %s307 = scalar_lea.sflag [#allocation7], %s306
        %s308 = sand.u32 %s53, 1
        %s309 = smul.addr %s308, 8
        %s310 = scalar_lea.vmem [#allocation6], %s309
        // Predicated region
        $region45: #{_lambda_.1} parent=43 // pred_check
          %p311 = pneg %p66
        $region46: #{_lambda_.1} parent=43 // pred_check_branch
          %313 = sbr.rel (%p311) target = $region48
        $region47: #{_lambda_.1} parent=43 // pred_region
          %314 = dma.done %s307, 128
        $region48: #{_lambda_.1} parent=43 // pred_fallthru
          _
        // Predicated region
        $region49: #{_lambda_.1} parent=43 // pred_check
          %p315 = pneg %p87
        $region50: #{_lambda_.1} parent=43 // pred_check_branch
          %317 = sbr.rel (%p315) target = $region52
        $region51: #{_lambda_.1} parent=43 // pred_region
          %318 = dma.done [#allocation10], 8192
        $region52: #{_lambda_.1} parent=43 // pred_fallthru
          _
        // Predicated region
        $region53: #{_lambda_.1} parent=43 // pred_check
          %p319 = pneg %p108
        $region54: #{_lambda_.1} parent=43 // pred_check_branch
          %321 = sbr.rel (%p319) target = $region56
        $region55: #{_lambda_.1} parent=43 // pred_region
          %322 = dma.done [#allocation10], 8192
        $region56: #{_lambda_.1} parent=43 // pred_fallthru
          _
        // Predicated region
        $region57: #{_lambda_.1} parent=43 // pred_check
          %p323 = pneg %p129
        $region58: #{_lambda_.1} parent=43 // pred_check_branch
          %325 = sbr.rel (%p323) target = $region60
        $region59: #{_lambda_.1} parent=43 // pred_region
          %326 = dma.done [#allocation13], 8192
        $region60: #{_lambda_.1} parent=43 // pred_fallthru
          _
        // Predicated region
        $region61: #{_lambda_.1} parent=43 // pred_check
          %p327 = pneg %p150
        $region62: #{_lambda_.1} parent=43 // pred_check_branch
          %329 = sbr.rel (%p327) target = $region64
        $region63: #{_lambda_.1} parent=43 // pred_region
          %330 = dma.done [#allocation13], 8192
        $region64: #{_lambda_.1} parent=43 // pred_fallthru
          _
        // Predicated region
        $region65: #{_lambda_.1} parent=43 // pred_check
          %p331 = pneg %p171
        $region66: #{_lambda_.1} parent=43 // pred_check_branch
          %333 = sbr.rel (%p331) target = $region68
        $region67: #{_lambda_.1} parent=43 // pred_region
          %334 = dma.done [#allocation16], 16
        $region68: #{_lambda_.1} parent=43 // pred_fallthru
          _
        %s335 = sand.u32 %s53, 1
        %s336 = scalar_lea.sflag [#allocation7], %s335
        %s337 = sand.u32 %s53, 1
        %s338 = smul.addr %s337, 8
        %s339 = scalar_lea.vmem [#allocation6], %s338
        %p340 = pneg %p66
        %p341 = pneg %p63
        %p342 = pneg %p87
        %p343 = pneg %p84
        %p344 = pneg %p108
        %p345 = pneg %p105
        %p346 = pneg %p129
        %p347 = pneg %p126
        %p348 = pneg %p150
        %p349 = pneg %p147
        %p350 = pneg %p171
        %p351 = pneg %p168
        %p352 = pneg %p199
        %p353 = pneg %p196
        %s354 = sand.u32 %s186, 1
        %s355 = scalar_lea.sflag [#allocation8], %s354
        %s356 = sand.u32 %s186, 1
        %s357 = smul.addr %s356, 8
        %s358 = scalar_lea.vmem [#allocation17], %s357
        %p359 = scmp.eq.s32.totalorder %s33, 0
        // Predicated region
        $region69: #{_lambda_.1} parent=43 // pred_check
          %p360 = pneg %p359
        $region70: #{_lambda_.1} parent=43 // pred_check_branch
          %362 = sbr.rel (%p360) target = $region72
        $region71: #{_lambda_.1} parent=43 // pred_region
          %v363 = vld [vmem:[%s310] sm:$0xff]
          %v364 = vld [vmem:[#allocation9] sm:$0xff]
          %v365 = vld [vmem:[#allocation9 + $0x8] sm:$0xff]
          %v366 = vld [vmem:[#allocation9 + $0x10] sm:$0xff]
          %v367 = vld [vmem:[#allocation9 + $0x18] sm:$0xff]
          %v368 = vld [vmem:[#allocation9 + $0x20] sm:$0xff]
          %v369 = vld [vmem:[#allocation9 + $0x28] sm:$0xff]
          %v370 = vld [vmem:[#allocation9 + $0x30] sm:$0xff]
          %v371 = vld [vmem:[#allocation9 + $0x38] sm:$0xff]
          %v372 = vld [vmem:[#allocation9 + $0x40] sm:$0xff]
          %v373 = vld [vmem:[#allocation9 + $0x48] sm:$0xff]
          %v374 = vld [vmem:[#allocation9 + $0x50] sm:$0xff]
          %v375 = vld [vmem:[#allocation9 + $0x58] sm:$0xff]
          %v376 = vld [vmem:[#allocation9 + $0x60] sm:$0xff]
          %v377 = vld [vmem:[#allocation9 + $0x68] sm:$0xff]
          %v378 = vld [vmem:[#allocation9 + $0x70] sm:$0xff]
          %v379 = vld [vmem:[#allocation9 + $0x78] sm:$0xff]
          %v380 = vld [vmem:[#allocation9 + $0x80] sm:$0xff]
          %v381 = vld [vmem:[#allocation9 + $0x88] sm:$0xff]
          %v382 = vld [vmem:[#allocation9 + $0x90] sm:$0xff]
          %v383 = vld [vmem:[#allocation9 + $0x98] sm:$0xff]
          %v384 = vld [vmem:[#allocation9 + $0xa0] sm:$0xff]
          %v385 = vld [vmem:[#allocation9 + $0xa8] sm:$0xff]
          %v386 = vld [vmem:[#allocation9 + $0xb0] sm:$0xff]
          %v387 = vld [vmem:[#allocation9 + $0xb8] sm:$0xff]
          %v388 = vld [vmem:[#allocation9 + $0xc0] sm:$0xff]
          %v389 = vld [vmem:[#allocation9 + $0xc8] sm:$0xff]
          %v390 = vld [vmem:[#allocation9 + $0xd0] sm:$0xff]
          %v391 = vld [vmem:[#allocation9 + $0xd8] sm:$0xff]
          %v392 = vld [vmem:[#allocation9 + $0xe0] sm:$0xff]
          %v393 = vld [vmem:[#allocation9 + $0xe8] sm:$0xff]
          %v394 = vld [vmem:[#allocation9 + $0xf0] sm:$0xff]
          %v395 = vld [vmem:[#allocation9 + $0xf8] sm:$0xff]
          %v396 = vld [vmem:[#allocation9 + $0x100] sm:$0xff]
          %v397 = vld [vmem:[#allocation9 + $0x108] sm:$0xff]
          %v398 = vld [vmem:[#allocation9 + $0x110] sm:$0xff]
          %v399 = vld [vmem:[#allocation9 + $0x118] sm:$0xff]
          %v400 = vld [vmem:[#allocation9 + $0x120] sm:$0xff]
          %v401 = vld [vmem:[#allocation9 + $0x128] sm:$0xff]
          %v402 = vld [vmem:[#allocation9 + $0x130] sm:$0xff]
          %v403 = vld [vmem:[#allocation9 + $0x138] sm:$0xff]
          %v404 = vld [vmem:[#allocation9 + $0x140] sm:$0xff]
          %v405 = vld [vmem:[#allocation9 + $0x148] sm:$0xff]
          %v406 = vld [vmem:[#allocation9 + $0x150] sm:$0xff]
          %v407 = vld [vmem:[#allocation9 + $0x158] sm:$0xff]
          %v408 = vld [vmem:[#allocation9 + $0x160] sm:$0xff]
          %v409 = vld [vmem:[#allocation9 + $0x168] sm:$0xff]
          %v410 = vld [vmem:[#allocation9 + $0x170] sm:$0xff]
          %v411 = vld [vmem:[#allocation9 + $0x178] sm:$0xff]
          %v412 = vld [vmem:[#allocation9 + $0x180] sm:$0xff]
          %v413 = vld [vmem:[#allocation9 + $0x188] sm:$0xff]
          %v414 = vld [vmem:[#allocation9 + $0x190] sm:$0xff]
          %v415 = vld [vmem:[#allocation9 + $0x198] sm:$0xff]
          %v416 = vld [vmem:[#allocation9 + $0x1a0] sm:$0xff]
          %v417 = vld [vmem:[#allocation9 + $0x1a8] sm:$0xff]
          %v418 = vld [vmem:[#allocation9 + $0x1b0] sm:$0xff]
          %v419 = vld [vmem:[#allocation9 + $0x1b8] sm:$0xff]
          %v420 = vld [vmem:[#allocation9 + $0x1c0] sm:$0xff]
          %v421 = vld [vmem:[#allocation9 + $0x1c8] sm:$0xff]
          %v422 = vld [vmem:[#allocation9 + $0x1d0] sm:$0xff]
          %v423 = vld [vmem:[#allocation9 + $0x1d8] sm:$0xff]
          %v424 = vld [vmem:[#allocation9 + $0x1e0] sm:$0xff]
          %v425 = vld [vmem:[#allocation9 + $0x1e8] sm:$0xff]
          %v426 = vld [vmem:[#allocation9 + $0x1f0] sm:$0xff]
          %v427 = vld [vmem:[#allocation9 + $0x1f8] sm:$0xff]
          %428 = vmatprep.subr.mxu0 %v365
          %429 = vmatpush1.msra.mxu0 %v364
          %430 = vmatprep.subr.mxu0 %v369
          %431 = vmatpush1.msra.mxu0 %v368
          %432 = vmatprep.subr.mxu0 %v373
          %433 = vmatpush1.msra.mxu0 %v372
          %434 = vmatprep.subr.mxu0 %v377
          %435 = vmatpush1.msra.mxu0 %v376
          %436 = vmatprep.subr.mxu0 %v381
          %437 = vmatpush1.msra.mxu0 %v380
          %438 = vmatprep.subr.mxu0 %v385
          %439 = vmatpush1.msra.mxu0 %v384
          %440 = vmatprep.subr.mxu0 %v389
          %441 = vmatpush1.msra.mxu0 %v388
          %442 = vmatprep.subr.mxu0 %v393
          %443 = vmatpush1.msra.mxu0 %v392
          %444 = vmatprep.subr.mxu0 %v397
          %445 = vmatpush1.msra.mxu0 %v396
          %446 = vmatprep.subr.mxu0 %v401
          %447 = vmatpush1.msra.mxu0 %v400
          %448 = vmatprep.subr.mxu0 %v405
          %449 = vmatpush1.msra.mxu0 %v404
          %450 = vmatprep.subr.mxu0 %v409
          %451 = vmatpush1.msra.mxu0 %v408
          %452 = vmatprep.subr.mxu0 %v413
          %453 = vmatpush1.msra.mxu0 %v412
          %454 = vmatprep.subr.mxu0 %v417
          %455 = vmatpush1.msra.mxu0 %v416
          %456 = vmatprep.subr.mxu0 %v421
          %457 = vmatpush1.msra.mxu0 %v420
          %458 = vmatprep.subr.mxu0 %v425
          %459 = vmatpush1.msra.mxu0 %v424
          %460 = vmatprep.subr.mxu0 0.0
          %461 = vmatpush1.msra.mxu0 0.0
          %462 = vmatprep.subr.mxu0 0.0
          %463 = vmatpush1.msra.mxu0 0.0
          %464 = vmatprep.subr.mxu0 0.0
          %465 = vmatpush1.msra.mxu0 0.0
          %466 = vmatprep.subr.mxu0 0.0
          %467 = vmatpush1.msra.mxu0 0.0
          %468 = vmatprep.subr.mxu0 0.0
          %469 = vmatpush1.msra.mxu0 0.0
          %470 = vmatprep.subr.mxu0 0.0
          %471 = vmatpush1.msra.mxu0 0.0
          %472 = vmatprep.subr.mxu0 0.0
          %473 = vmatpush1.msra.mxu0 0.0
          %474 = vmatprep.subr.mxu0 0.0
          %475 = vmatpush1.msra.mxu0 0.0
          %476 = vmatprep.subr.mxu0 0.0
          %477 = vmatpush1.msra.mxu0 0.0
          %478 = vmatprep.subr.mxu0 0.0
          %479 = vmatpush1.msra.mxu0 0.0
          %480 = vmatprep.subr.mxu0 0.0
          %481 = vmatpush1.msra.mxu0 0.0
          %482 = vmatprep.subr.mxu0 0.0
          %483 = vmatpush1.msra.mxu0 0.0
          %484 = vmatprep.subr.mxu0 0.0
          %485 = vmatpush1.msra.mxu0 0.0
          %486 = vmatprep.subr.mxu0 0.0
          %487 = vmatpush1.msra.mxu0 0.0
          %488 = vmatprep.subr.mxu0 0.0
          %489 = vmatpush1.msra.mxu0 0.0
          %490 = vmatprep.subr.mxu0 0.0
          %491 = vmatpush1.msra.mxu0 0.0
          %492 = vmatprep.mubr.f32.mxu0 0.0
          %493 = vmatmul.mubr.f32.gmra.mrb[0].mxu0 %v363
          %v494 = vpop.f32.mrb[0].mxu0
          %v495 = vadd.f32 0.0, %v494
          %v496 = vpop.f32.mrb[0].mxu0
          %v497 = vadd.f32 0.0, %v496
          %498 = vdwg.mxu0
          %499 = vmatprep.subr.mxu0 %v367
          %500 = vmatpush1.msra.mxu0 %v366
          %501 = vmatprep.subr.mxu0 %v371
          %502 = vmatpush1.msra.mxu0 %v370
          %503 = vmatprep.subr.mxu0 %v375
          %504 = vmatpush1.msra.mxu0 %v374
          %505 = vmatprep.subr.mxu0 %v379
          %506 = vmatpush1.msra.mxu0 %v378
          %507 = vmatprep.subr.mxu0 %v383
          %508 = vmatpush1.msra.mxu0 %v382
          %509 = vmatprep.subr.mxu0 %v387
          %510 = vmatpush1.msra.mxu0 %v386
          %511 = vmatprep.subr.mxu0 %v391
          %512 = vmatpush1.msra.mxu0 %v390
          %513 = vmatprep.subr.mxu0 %v395
          %514 = vmatpush1.msra.mxu0 %v394
          %515 = vmatprep.subr.mxu0 %v399
          %516 = vmatpush1.msra.mxu0 %v398
          %517 = vmatprep.subr.mxu0 %v403
          %518 = vmatpush1.msra.mxu0 %v402
          %519 = vmatprep.subr.mxu0 %v407
          %520 = vmatpush1.msra.mxu0 %v406
          %521 = vmatprep.subr.mxu0 %v411
          %522 = vmatpush1.msra.mxu0 %v410
          %523 = vmatprep.subr.mxu0 %v415
          %524 = vmatpush1.msra.mxu0 %v414
          %525 = vmatprep.subr.mxu0 %v419
          %526 = vmatpush1.msra.mxu0 %v418
          %527 = vmatprep.subr.mxu0 %v423
          %528 = vmatpush1.msra.mxu0 %v422
          %529 = vmatprep.subr.mxu0 %v427
          %530 = vmatpush1.msra.mxu0 %v426
          %531 = vmatprep.subr.mxu0 0.0
          %532 = vmatpush1.msra.mxu0 0.0
          %533 = vmatprep.subr.mxu0 0.0
          %534 = vmatpush1.msra.mxu0 0.0
          %535 = vmatprep.subr.mxu0 0.0
          %536 = vmatpush1.msra.mxu0 0.0
          %537 = vmatprep.subr.mxu0 0.0
          %538 = vmatpush1.msra.mxu0 0.0
          %539 = vmatprep.subr.mxu0 0.0
          %540 = vmatpush1.msra.mxu0 0.0
          %541 = vmatprep.subr.mxu0 0.0
          %542 = vmatpush1.msra.mxu0 0.0
          %543 = vmatprep.subr.mxu0 0.0
          %544 = vmatpush1.msra.mxu0 0.0
          %545 = vmatprep.subr.mxu0 0.0
          %546 = vmatpush1.msra.mxu0 0.0
          %547 = vmatprep.subr.mxu0 0.0
          %548 = vmatpush1.msra.mxu0 0.0
          %549 = vmatprep.subr.mxu0 0.0
          %550 = vmatpush1.msra.mxu0 0.0
          %551 = vmatprep.subr.mxu0 0.0
          %552 = vmatpush1.msra.mxu0 0.0
          %553 = vmatprep.subr.mxu0 0.0
          %554 = vmatpush1.msra.mxu0 0.0
          %555 = vmatprep.subr.mxu0 0.0
          %556 = vmatpush1.msra.mxu0 0.0
          %557 = vmatprep.subr.mxu0 0.0
          %558 = vmatpush1.msra.mxu0 0.0
          %559 = vmatprep.subr.mxu0 0.0
          %560 = vmatpush1.msra.mxu0 0.0
          %561 = vmatprep.subr.mxu0 0.0
          %562 = vmatpush1.msra.mxu0 0.0
          %563 = vmatprep.mubr.f32.mxu0 0.0
          %564 = vmatmul.mubr.f32.gmra.mrb[0].mxu0 %v363
          %v565 = vpop.f32.mrb[0].mxu0
          %v566 = vadd.f32 0.0, %v565
          %v567 = vpop.f32.mrb[0].mxu0
          %v568 = vadd.f32 0.0, %v567
          %569 = vdwg.mxu0
          %v570 = vmul.f32 %v495, 0.088388346
          %v571 = vmul.f32 %v497, 0.088388346
          %v572 = vmul.f32 %v566, 0.088388346
          %v573 = vmul.f32 %v568, 0.088388346
          %574 = vst [vmem:[#allocation2] sm:$0xff] %v570
          %575 = vst [vmem:[#allocation2 + $0x8] sm:$0xff] %v571
          %576 = vst [vmem:[#allocation2 + $0x10] sm:$0xff] %v572
          %577 = vst [vmem:[#allocation2 + $0x18] sm:$0xff] %v573
          %vm578 = vcmask 7168
          %579 = vst.msk [vmem:[#allocation3] sm:$0xff] %vm578, -inf
          %580 = vst.msk [vmem:[#allocation3 + $0x8] sm:$0xff] %vm578, -inf
          %581 = vst.msk [vmem:[#allocation3 + $0x10] sm:$0xff] %vm578, -inf
          %582 = vst.msk [vmem:[#allocation3 + $0x18] sm:$0xff] %vm578, -inf
          %583 = vst.msk [vmem:[#allocation4] sm:$0xff] %vm578, 0.0
          %584 = vst.msk [vmem:[#allocation4 + $0x8] sm:$0xff] %vm578, 0.0
          %585 = vst.msk [vmem:[#allocation4 + $0x10] sm:$0xff] %vm578, 0.0
          %586 = vst.msk [vmem:[#allocation4 + $0x18] sm:$0xff] %vm578, 0.0
          %587 = vst [vmem:[#allocation5] sm:$0xff] 0.0
          %588 = vst [vmem:[#allocation5 + $0x8] sm:$0xff] 0.0
          %589 = vst [vmem:[#allocation5 + $0x10] sm:$0xff] 0.0
          %590 = vst [vmem:[#allocation5 + $0x18] sm:$0xff] 0.0
        $region72: #{_lambda_.1} parent=43 // pred_fallthru
          _
        %v591 = vld [vmem:[%s310] sm:$0xff]
        %v592 = vld [vmem:[#allocation11] sm:$0xff]
        %v593 = vld [vmem:[#allocation11 + $0x8] sm:$0xff]
        %v594 = vld [vmem:[#allocation11 + $0x10] sm:$0xff]
        %v595 = vld [vmem:[#allocation11 + $0x18] sm:$0xff]
        %v596 = vld [vmem:[#allocation11 + $0x20] sm:$0xff]
        %v597 = vld [vmem:[#allocation11 + $0x28] sm:$0xff]
        %v598 = vld [vmem:[#allocation11 + $0x30] sm:$0xff]
        %v599 = vld [vmem:[#allocation11 + $0x38] sm:$0xff]
        %v600 = vld [vmem:[#allocation11 + $0x40] sm:$0xff]
        %v601 = vld [vmem:[#allocation11 + $0x48] sm:$0xff]
        %v602 = vld [vmem:[#allocation11 + $0x50] sm:$0xff]
        %v603 = vld [vmem:[#allocation11 + $0x58] sm:$0xff]
        %v604 = vld [vmem:[#allocation11 + $0x60] sm:$0xff]
        %v605 = vld [vmem:[#allocation11 + $0x68] sm:$0xff]
        %v606 = vld [vmem:[#allocation11 + $0x70] sm:$0xff]
        %v607 = vld [vmem:[#allocation11 + $0x78] sm:$0xff]
        %v608 = vld [vmem:[#allocation11 + $0x80] sm:$0xff]
        %v609 = vld [vmem:[#allocation11 + $0x88] sm:$0xff]
        %v610 = vld [vmem:[#allocation11 + $0x90] sm:$0xff]
        %v611 = vld [vmem:[#allocation11 + $0x98] sm:$0xff]
        %v612 = vld [vmem:[#allocation11 + $0xa0] sm:$0xff]
        %v613 = vld [vmem:[#allocation11 + $0xa8] sm:$0xff]
        %v614 = vld [vmem:[#allocation11 + $0xb0] sm:$0xff]
        %v615 = vld [vmem:[#allocation11 + $0xb8] sm:$0xff]
        %v616 = vld [vmem:[#allocation11 + $0xc0] sm:$0xff]
        %v617 = vld [vmem:[#allocation11 + $0xc8] sm:$0xff]
        %v618 = vld [vmem:[#allocation11 + $0xd0] sm:$0xff]
        %v619 = vld [vmem:[#allocation11 + $0xd8] sm:$0xff]
        %v620 = vld [vmem:[#allocation11 + $0xe0] sm:$0xff]
        %v621 = vld [vmem:[#allocation11 + $0xe8] sm:$0xff]
        %v622 = vld [vmem:[#allocation11 + $0xf0] sm:$0xff]
        %v623 = vld [vmem:[#allocation11 + $0xf8] sm:$0xff]
        %v624 = vld [vmem:[#allocation11 + $0x100] sm:$0xff]
        %v625 = vld [vmem:[#allocation11 + $0x108] sm:$0xff]
        %v626 = vld [vmem:[#allocation11 + $0x110] sm:$0xff]
        %v627 = vld [vmem:[#allocation11 + $0x118] sm:$0xff]
        %v628 = vld [vmem:[#allocation11 + $0x120] sm:$0xff]
        %v629 = vld [vmem:[#allocation11 + $0x128] sm:$0xff]
        %v630 = vld [vmem:[#allocation11 + $0x130] sm:$0xff]
        %v631 = vld [vmem:[#allocation11 + $0x138] sm:$0xff]
        %v632 = vld [vmem:[#allocation11 + $0x140] sm:$0xff]
        %v633 = vld [vmem:[#allocation11 + $0x148] sm:$0xff]
        %v634 = vld [vmem:[#allocation11 + $0x150] sm:$0xff]
        %v635 = vld [vmem:[#allocation11 + $0x158] sm:$0xff]
        %v636 = vld [vmem:[#allocation11 + $0x160] sm:$0xff]
        %v637 = vld [vmem:[#allocation11 + $0x168] sm:$0xff]
        %v638 = vld [vmem:[#allocation11 + $0x170] sm:$0xff]
        %v639 = vld [vmem:[#allocation11 + $0x178] sm:$0xff]
        %v640 = vld [vmem:[#allocation11 + $0x180] sm:$0xff]
        %v641 = vld [vmem:[#allocation11 + $0x188] sm:$0xff]
        %v642 = vld [vmem:[#allocation11 + $0x190] sm:$0xff]
        %v643 = vld [vmem:[#allocation11 + $0x198] sm:$0xff]
        %v644 = vld [vmem:[#allocation11 + $0x1a0] sm:$0xff]
        %v645 = vld [vmem:[#allocation11 + $0x1a8] sm:$0xff]
        %v646 = vld [vmem:[#allocation11 + $0x1b0] sm:$0xff]
        %v647 = vld [vmem:[#allocation11 + $0x1b8] sm:$0xff]
        %v648 = vld [vmem:[#allocation11 + $0x1c0] sm:$0xff]
        %v649 = vld [vmem:[#allocation11 + $0x1c8] sm:$0xff]
        %v650 = vld [vmem:[#allocation11 + $0x1d0] sm:$0xff]
        %v651 = vld [vmem:[#allocation11 + $0x1d8] sm:$0xff]
        %v652 = vld [vmem:[#allocation11 + $0x1e0] sm:$0xff]
        %v653 = vld [vmem:[#allocation11 + $0x1e8] sm:$0xff]
        %v654 = vld [vmem:[#allocation11 + $0x1f0] sm:$0xff]
        %v655 = vld [vmem:[#allocation11 + $0x1f8] sm:$0xff]
        %656 = vmatprep.subr.mxu0 %v593
        %657 = vmatpush1.msra.mxu0 %v592
        %658 = vmatprep.subr.mxu0 %v597
        %659 = vmatpush1.msra.mxu0 %v596
        %660 = vmatprep.subr.mxu0 %v601
        %661 = vmatpush1.msra.mxu0 %v600
        %662 = vmatprep.subr.mxu0 %v605
        %663 = vmatpush1.msra.mxu0 %v604
        %664 = vmatprep.subr.mxu0 %v609
        %665 = vmatpush1.msra.mxu0 %v608
        %666 = vmatprep.subr.mxu0 %v613
        %667 = vmatpush1.msra.mxu0 %v612
        %668 = vmatprep.subr.mxu0 %v617
        %669 = vmatpush1.msra.mxu0 %v616
        %670 = vmatprep.subr.mxu0 %v621
        %671 = vmatpush1.msra.mxu0 %v620
        %672 = vmatprep.subr.mxu0 %v625
        %673 = vmatpush1.msra.mxu0 %v624
        %674 = vmatprep.subr.mxu0 %v629
        %675 = vmatpush1.msra.mxu0 %v628
        %676 = vmatprep.subr.mxu0 %v633
        %677 = vmatpush1.msra.mxu0 %v632
        %678 = vmatprep.subr.mxu0 %v637
        %679 = vmatpush1.msra.mxu0 %v636
        %680 = vmatprep.subr.mxu0 %v641
        %681 = vmatpush1.msra.mxu0 %v640
        %682 = vmatprep.subr.mxu0 %v645
        %683 = vmatpush1.msra.mxu0 %v644
        %684 = vmatprep.subr.mxu0 %v649
        %685 = vmatpush1.msra.mxu0 %v648
        %686 = vmatprep.subr.mxu0 %v653
        %687 = vmatpush1.msra.mxu0 %v652
        %688 = vmatprep.subr.mxu0 0.0
        %689 = vmatpush1.msra.mxu0 0.0
        %690 = vmatprep.subr.mxu0 0.0
        %691 = vmatpush1.msra.mxu0 0.0
        %692 = vmatprep.subr.mxu0 0.0
        %693 = vmatpush1.msra.mxu0 0.0
        %694 = vmatprep.subr.mxu0 0.0
        %695 = vmatpush1.msra.mxu0 0.0
        %696 = vmatprep.subr.mxu0 0.0
        %697 = vmatpush1.msra.mxu0 0.0
        %698 = vmatprep.subr.mxu0 0.0
        %699 = vmatpush1.msra.mxu0 0.0
        %700 = vmatprep.subr.mxu0 0.0
        %701 = vmatpush1.msra.mxu0 0.0
        %702 = vmatprep.subr.mxu0 0.0
        %703 = vmatpush1.msra.mxu0 0.0
        %704 = vmatprep.subr.mxu0 0.0
        %705 = vmatpush1.msra.mxu0 0.0
        %706 = vmatprep.subr.mxu0 0.0
        %707 = vmatpush1.msra.mxu0 0.0
        %708 = vmatprep.subr.mxu0 0.0
        %709 = vmatpush1.msra.mxu0 0.0
        %710 = vmatprep.subr.mxu0 0.0
        %711 = vmatpush1.msra.mxu0 0.0
        %712 = vmatprep.subr.mxu0 0.0
        %713 = vmatpush1.msra.mxu0 0.0
        %714 = vmatprep.subr.mxu0 0.0
        %715 = vmatpush1.msra.mxu0 0.0
        %716 = vmatprep.subr.mxu0 0.0
        %717 = vmatpush1.msra.mxu0 0.0
        %718 = vmatprep.subr.mxu0 0.0
        %719 = vmatpush1.msra.mxu0 0.0
        %720 = vmatprep.mubr.f32.mxu0 0.0
        %721 = vmatmul.mubr.f32.gmra.mrb[0].mxu0 %v591
        %v722 = vpop.f32.mrb[0].mxu0
        %v723 = vadd.f32 0.0, %v722
        %v724 = vpop.f32.mrb[0].mxu0
        %v725 = vadd.f32 0.0, %v724
        %726 = vdwg.mxu0
        %727 = vmatprep.subr.mxu0 %v595
        %728 = vmatpush1.msra.mxu0 %v594
        %729 = vmatprep.subr.mxu0 %v599
        %730 = vmatpush1.msra.mxu0 %v598
        %731 = vmatprep.subr.mxu0 %v603
        %732 = vmatpush1.msra.mxu0 %v602
        %733 = vmatprep.subr.mxu0 %v607
        %734 = vmatpush1.msra.mxu0 %v606
        %735 = vmatprep.subr.mxu0 %v611
        %736 = vmatpush1.msra.mxu0 %v610
        %737 = vmatprep.subr.mxu0 %v615
        %738 = vmatpush1.msra.mxu0 %v614
        %739 = vmatprep.subr.mxu0 %v619
        %740 = vmatpush1.msra.mxu0 %v618
        %741 = vmatprep.subr.mxu0 %v623
        %742 = vmatpush1.msra.mxu0 %v622
        %743 = vmatprep.subr.mxu0 %v627
        %744 = vmatpush1.msra.mxu0 %v626
        %745 = vmatprep.subr.mxu0 %v631
        %746 = vmatpush1.msra.mxu0 %v630
        %747 = vmatprep.subr.mxu0 %v635
        %748 = vmatpush1.msra.mxu0 %v634
        %749 = vmatprep.subr.mxu0 %v639
        %750 = vmatpush1.msra.mxu0 %v638
        %751 = vmatprep.subr.mxu0 %v643
        %752 = vmatpush1.msra.mxu0 %v642
        %753 = vmatprep.subr.mxu0 %v647
        %754 = vmatpush1.msra.mxu0 %v646
        %755 = vmatprep.subr.mxu0 %v651
        %756 = vmatpush1.msra.mxu0 %v650
        %757 = vmatprep.subr.mxu0 %v655
        %758 = vmatpush1.msra.mxu0 %v654
        %759 = vmatprep.subr.mxu0 0.0
        %760 = vmatpush1.msra.mxu0 0.0
        %761 = vmatprep.subr.mxu0 0.0
        %762 = vmatpush1.msra.mxu0 0.0
        %763 = vmatprep.subr.mxu0 0.0
        %764 = vmatpush1.msra.mxu0 0.0
        %765 = vmatprep.subr.mxu0 0.0
        %766 = vmatpush1.msra.mxu0 0.0
        %767 = vmatprep.subr.mxu0 0.0
        %768 = vmatpush1.msra.mxu0 0.0
        %769 = vmatprep.subr.mxu0 0.0
        %770 = vmatpush1.msra.mxu0 0.0
        %771 = vmatprep.subr.mxu0 0.0
        %772 = vmatpush1.msra.mxu0 0.0
        %773 = vmatprep.subr.mxu0 0.0
        %774 = vmatpush1.msra.mxu0 0.0
        %775 = vmatprep.subr.mxu0 0.0
        %776 = vmatpush1.msra.mxu0 0.0
        %777 = vmatprep.subr.mxu0 0.0
        %778 = vmatpush1.msra.mxu0 0.0
        %779 = vmatprep.subr.mxu0 0.0
        %780 = vmatpush1.msra.mxu0 0.0
        %781 = vmatprep.subr.mxu0 0.0
        %782 = vmatpush1.msra.mxu0 0.0
        %783 = vmatprep.subr.mxu0 0.0
        %784 = vmatpush1.msra.mxu0 0.0
        %785 = vmatprep.subr.mxu0 0.0
        %786 = vmatpush1.msra.mxu0 0.0
        %787 = vmatprep.subr.mxu0 0.0
        %788 = vmatpush1.msra.mxu0 0.0
        %789 = vmatprep.subr.mxu0 0.0
        %790 = vmatpush1.msra.mxu0 0.0
        %791 = vmatprep.mubr.f32.mxu0 0.0
        %792 = vmatmul.mubr.f32.gmra.mrb[0].mxu0 %v591
        %v793 = vpop.f32.mrb[0].mxu0
        %v794 = vadd.f32 0.0, %v793
        %v795 = vpop.f32.mrb[0].mxu0
        %v796 = vadd.f32 0.0, %v795
        %797 = vdwg.mxu0
        %v798 = vld [vmem:[#allocation12] sm:$0xff]
        %v799 = vld [vmem:[#allocation12 + $0x8] sm:$0xff]
        %v800 = vld [vmem:[#allocation12 + $0x10] sm:$0xff]
        %v801 = vld [vmem:[#allocation12 + $0x18] sm:$0xff]
        %v802 = vld [vmem:[#allocation12 + $0x20] sm:$0xff]
        %v803 = vld [vmem:[#allocation12 + $0x28] sm:$0xff]
        %v804 = vld [vmem:[#allocation12 + $0x30] sm:$0xff]
        %v805 = vld [vmem:[#allocation12 + $0x38] sm:$0xff]
        %v806 = vld [vmem:[#allocation12 + $0x40] sm:$0xff]
        %v807 = vld [vmem:[#allocation12 + $0x48] sm:$0xff]
        %v808 = vld [vmem:[#allocation12 + $0x50] sm:$0xff]
        %v809 = vld [vmem:[#allocation12 + $0x58] sm:$0xff]
        %v810 = vld [vmem:[#allocation12 + $0x60] sm:$0xff]
        %v811 = vld [vmem:[#allocation12 + $0x68] sm:$0xff]
        %v812 = vld [vmem:[#allocation12 + $0x70] sm:$0xff]
        %v813 = vld [vmem:[#allocation12 + $0x78] sm:$0xff]
        %v814 = vld [vmem:[#allocation12 + $0x80] sm:$0xff]
        %v815 = vld [vmem:[#allocation12 + $0x88] sm:$0xff]
        %v816 = vld [vmem:[#allocation12 + $0x90] sm:$0xff]
        %v817 = vld [vmem:[#allocation12 + $0x98] sm:$0xff]
        %v818 = vld [vmem:[#allocation12 + $0xa0] sm:$0xff]
        %v819 = vld [vmem:[#allocation12 + $0xa8] sm:$0xff]
        %v820 = vld [vmem:[#allocation12 + $0xb0] sm:$0xff]
        %v821 = vld [vmem:[#allocation12 + $0xb8] sm:$0xff]
        %v822 = vld [vmem:[#allocation12 + $0xc0] sm:$0xff]
        %v823 = vld [vmem:[#allocation12 + $0xc8] sm:$0xff]
        %v824 = vld [vmem:[#allocation12 + $0xd0] sm:$0xff]
        %v825 = vld [vmem:[#allocation12 + $0xd8] sm:$0xff]
        %v826 = vld [vmem:[#allocation12 + $0xe0] sm:$0xff]
        %v827 = vld [vmem:[#allocation12 + $0xe8] sm:$0xff]
        %v828 = vld [vmem:[#allocation12 + $0xf0] sm:$0xff]
        %v829 = vld [vmem:[#allocation12 + $0xf8] sm:$0xff]
        %v830 = vld [vmem:[#allocation12 + $0x100] sm:$0xff]
        %v831 = vld [vmem:[#allocation12 + $0x108] sm:$0xff]
        %v832 = vld [vmem:[#allocation12 + $0x110] sm:$0xff]
        %v833 = vld [vmem:[#allocation12 + $0x118] sm:$0xff]
        %v834 = vld [vmem:[#allocation12 + $0x120] sm:$0xff]
        %v835 = vld [vmem:[#allocation12 + $0x128] sm:$0xff]
        %v836 = vld [vmem:[#allocation12 + $0x130] sm:$0xff]
        %v837 = vld [vmem:[#allocation12 + $0x138] sm:$0xff]
        %v838 = vld [vmem:[#allocation12 + $0x140] sm:$0xff]
        %v839 = vld [vmem:[#allocation12 + $0x148] sm:$0xff]
        %v840 = vld [vmem:[#allocation12 + $0x150] sm:$0xff]
        %v841 = vld [vmem:[#allocation12 + $0x158] sm:$0xff]
        %v842 = vld [vmem:[#allocation12 + $0x160] sm:$0xff]
        %v843 = vld [vmem:[#allocation12 + $0x168] sm:$0xff]
        %v844 = vld [vmem:[#allocation12 + $0x170] sm:$0xff]
        %v845 = vld [vmem:[#allocation12 + $0x178] sm:$0xff]
        %v846 = vld [vmem:[#allocation12 + $0x180] sm:$0xff]
        %v847 = vld [vmem:[#allocation12 + $0x188] sm:$0xff]
        %v848 = vld [vmem:[#allocation12 + $0x190] sm:$0xff]
        %v849 = vld [vmem:[#allocation12 + $0x198] sm:$0xff]
        %v850 = vld [vmem:[#allocation12 + $0x1a0] sm:$0xff]
        %v851 = vld [vmem:[#allocation12 + $0x1a8] sm:$0xff]
        %v852 = vld [vmem:[#allocation12 + $0x1b0] sm:$0xff]
        %v853 = vld [vmem:[#allocation12 + $0x1b8] sm:$0xff]
        %v854 = vld [vmem:[#allocation12 + $0x1c0] sm:$0xff]
        %v855 = vld [vmem:[#allocation12 + $0x1c8] sm:$0xff]
        %v856 = vld [vmem:[#allocation12 + $0x1d0] sm:$0xff]
        %v857 = vld [vmem:[#allocation12 + $0x1d8] sm:$0xff]
        %v858 = vld [vmem:[#allocation12 + $0x1e0] sm:$0xff]
        %v859 = vld [vmem:[#allocation12 + $0x1e8] sm:$0xff]
        %v860 = vld [vmem:[#allocation12 + $0x1f0] sm:$0xff]
        %v861 = vld [vmem:[#allocation12 + $0x1f8] sm:$0xff]
        %862 = vmatprep.subr.mxu0 %v799
        %863 = vmatpush1.msra.mxu0 %v798
        %864 = vmatprep.subr.mxu0 %v803
        %865 = vmatpush1.msra.mxu0 %v802
        %866 = vmatprep.subr.mxu0 %v807
        %867 = vmatpush1.msra.mxu0 %v806
        %868 = vmatprep.subr.mxu0 %v811
        %869 = vmatpush1.msra.mxu0 %v810
        %870 = vmatprep.subr.mxu0 %v815
        %871 = vmatpush1.msra.mxu0 %v814
        %872 = vmatprep.subr.mxu0 %v819
        %873 = vmatpush1.msra.mxu0 %v818
        %874 = vmatprep.subr.mxu0 %v823
        %875 = vmatpush1.msra.mxu0 %v822
        %876 = vmatprep.subr.mxu0 %v827
        %877 = vmatpush1.msra.mxu0 %v826
        %878 = vmatprep.subr.mxu0 %v831
        %879 = vmatpush1.msra.mxu0 %v830
        %880 = vmatprep.subr.mxu0 %v835
        %881 = vmatpush1.msra.mxu0 %v834
        %882 = vmatprep.subr.mxu0 %v839
        %883 = vmatpush1.msra.mxu0 %v838
        %884 = vmatprep.subr.mxu0 %v843
        %885 = vmatpush1.msra.mxu0 %v842
        %886 = vmatprep.subr.mxu0 %v847
        %887 = vmatpush1.msra.mxu0 %v846
        %888 = vmatprep.subr.mxu0 %v851
        %889 = vmatpush1.msra.mxu0 %v850
        %890 = vmatprep.subr.mxu0 %v855
        %891 = vmatpush1.msra.mxu0 %v854
        %892 = vmatprep.subr.mxu0 %v859
        %893 = vmatpush1.msra.mxu0 %v858
        %894 = vmatprep.subr.mxu0 0.0
        %895 = vmatpush1.msra.mxu0 0.0
        %896 = vmatprep.subr.mxu0 0.0
        %897 = vmatpush1.msra.mxu0 0.0
        %898 = vmatprep.subr.mxu0 0.0
        %899 = vmatpush1.msra.mxu0 0.0
        %900 = vmatprep.subr.mxu0 0.0
        %901 = vmatpush1.msra.mxu0 0.0
        %902 = vmatprep.subr.mxu0 0.0
        %903 = vmatpush1.msra.mxu0 0.0
        %904 = vmatprep.subr.mxu0 0.0
        %905 = vmatpush1.msra.mxu0 0.0
        %906 = vmatprep.subr.mxu0 0.0
        %907 = vmatpush1.msra.mxu0 0.0
        %908 = vmatprep.subr.mxu0 0.0
        %909 = vmatpush1.msra.mxu0 0.0
        %910 = vmatprep.subr.mxu0 0.0
        %911 = vmatpush1.msra.mxu0 0.0
        %912 = vmatprep.subr.mxu0 0.0
        %913 = vmatpush1.msra.mxu0 0.0
        %914 = vmatprep.subr.mxu0 0.0
        %915 = vmatpush1.msra.mxu0 0.0
        %916 = vmatprep.subr.mxu0 0.0
        %917 = vmatpush1.msra.mxu0 0.0
        %918 = vmatprep.subr.mxu0 0.0
        %919 = vmatpush1.msra.mxu0 0.0
        %920 = vmatprep.subr.mxu0 0.0
        %921 = vmatpush1.msra.mxu0 0.0
        %922 = vmatprep.subr.mxu0 0.0
        %923 = vmatpush1.msra.mxu0 0.0
        %924 = vmatprep.subr.mxu0 0.0
        %925 = vmatpush1.msra.mxu0 0.0
        %926 = vmatprep.mubr.f32.mxu0 0.0
        %927 = vmatmul.mubr.f32.gmra.mrb[0].mxu0 %v591
        %v928 = vpop.f32.mrb[0].mxu0
        %v929 = vadd.f32 0.0, %v928
        %v930 = vpop.f32.mrb[0].mxu0
        %v931 = vadd.f32 0.0, %v930
        %932 = vdwg.mxu0
        %933 = vmatprep.subr.mxu0 %v801
        %934 = vmatpush1.msra.mxu0 %v800
        %935 = vmatprep.subr.mxu0 %v805
        %936 = vmatpush1.msra.mxu0 %v804
        %937 = vmatprep.subr.mxu0 %v809
        %938 = vmatpush1.msra.mxu0 %v808
        %939 = vmatprep.subr.mxu0 %v813
        %940 = vmatpush1.msra.mxu0 %v812
        %941 = vmatprep.subr.mxu0 %v817
        %942 = vmatpush1.msra.mxu0 %v816
        %943 = vmatprep.subr.mxu0 %v821
        %944 = vmatpush1.msra.mxu0 %v820
        %945 = vmatprep.subr.mxu0 %v825
        %946 = vmatpush1.msra.mxu0 %v824
        %947 = vmatprep.subr.mxu0 %v829
        %948 = vmatpush1.msra.mxu0 %v828
        %949 = vmatprep.subr.mxu0 %v833
        %950 = vmatpush1.msra.mxu0 %v832
        %951 = vmatprep.subr.mxu0 %v837
        %952 = vmatpush1.msra.mxu0 %v836
        %953 = vmatprep.subr.mxu0 %v841
        %954 = vmatpush1.msra.mxu0 %v840
        %955 = vmatprep.subr.mxu0 %v845
        %956 = vmatpush1.msra.mxu0 %v844
        %957 = vmatprep.subr.mxu0 %v849
        %958 = vmatpush1.msra.mxu0 %v848
        %959 = vmatprep.subr.mxu0 %v853
        %960 = vmatpush1.msra.mxu0 %v852
        %961 = vmatprep.subr.mxu0 %v857
        %962 = vmatpush1.msra.mxu0 %v856
        %963 = vmatprep.subr.mxu0 %v861
        %964 = vmatpush1.msra.mxu0 %v860
        %965 = vmatprep.subr.mxu0 0.0
        %966 = vmatpush1.msra.mxu0 0.0
        %967 = vmatprep.subr.mxu0 0.0
        %968 = vmatpush1.msra.mxu0 0.0
        %969 = vmatprep.subr.mxu0 0.0
        %970 = vmatpush1.msra.mxu0 0.0
        %971 = vmatprep.subr.mxu0 0.0
        %972 = vmatpush1.msra.mxu0 0.0
        %973 = vmatprep.subr.mxu0 0.0
        %974 = vmatpush1.msra.mxu0 0.0
        %975 = vmatprep.subr.mxu0 0.0
        %976 = vmatpush1.msra.mxu0 0.0
        %977 = vmatprep.subr.mxu0 0.0
        %978 = vmatpush1.msra.mxu0 0.0
        %979 = vmatprep.subr.mxu0 0.0
        %980 = vmatpush1.msra.mxu0 0.0
        %981 = vmatprep.subr.mxu0 0.0
        %982 = vmatpush1.msra.mxu0 0.0
        %983 = vmatprep.subr.mxu0 0.0
        %984 = vmatpush1.msra.mxu0 0.0
        %985 = vmatprep.subr.mxu0 0.0
        %986 = vmatpush1.msra.mxu0 0.0
        %987 = vmatprep.subr.mxu0 0.0
        %988 = vmatpush1.msra.mxu0 0.0
        %989 = vmatprep.subr.mxu0 0.0
        %990 = vmatpush1.msra.mxu0 0.0
        %991 = vmatprep.subr.mxu0 0.0
        %992 = vmatpush1.msra.mxu0 0.0
        %993 = vmatprep.subr.mxu0 0.0
        %994 = vmatpush1.msra.mxu0 0.0
        %995 = vmatprep.subr.mxu0 0.0
        %996 = vmatpush1.msra.mxu0 0.0
        %997 = vmatprep.mubr.f32.mxu0 0.0
        %998 = vmatmul.mubr.f32.gmra.mrb[0].mxu0 %v591
        %v999 = vpop.f32.mrb[0].mxu0
        %v1000 = vadd.f32 0.0, %v999
        %v1001 = vpop.f32.mrb[0].mxu0
        %v1002 = vadd.f32 0.0, %v1001
        %1003 = vdwg.mxu0
        %v1004 = vld [vmem:[#allocation2] sm:$0xff]
        %v1005 = vld [vmem:[#allocation2 + $0x8] sm:$0xff]
        %v1006 = vld [vmem:[#allocation2 + $0x10] sm:$0xff]
        %v1007 = vld [vmem:[#allocation2 + $0x18] sm:$0xff]
        %1008 = vmatprep.subr.mxu0 0.0
        %1009 = vmatpush1.xpose.msra.mxu0 %v723
        %1010 = vmatprep.subr.mxu0 0.0
        %1011 = vmatpush1.xpose.msra.mxu0 0.0
        %1012 = vmatprep.subr.mxu0 0.0
        %1013 = vmatpush1.xpose.msra.mxu0 0.0
        %1014 = vmatprep.subr.mxu0 0.0
        %1015 = vmatpush1.xpose.msra.mxu0 0.0
        %1016 = vmatprep.subr.mxu0 0.0
        %1017 = vmatpush1.xpose.msra.mxu0 0.0
        %1018 = vmatprep.subr.mxu0 0.0
        %1019 = vmatpush1.xpose.msra.mxu0 0.0
        %1020 = vmatprep.subr.mxu0 0.0
        %1021 = vmatpush1.xpose.msra.mxu0 0.0
        %1022 = vmatprep.subr.mxu0 0.0
        %1023 = vmatpush1.xpose.msra.mxu0 0.0
        %1024 = vmatprep.subr.mxu0 0.0
        %1025 = vmatpush1.xpose.msra.mxu0 0.0
        %1026 = vmatprep.subr.mxu0 0.0
        %1027 = vmatpush1.xpose.msra.mxu0 0.0
        %1028 = vmatprep.subr.mxu0 0.0
        %1029 = vmatpush1.xpose.msra.mxu0 0.0
        %1030 = vmatprep.subr.mxu0 0.0
        %1031 = vmatpush1.xpose.msra.mxu0 0.0
        %1032 = vmatprep.subr.mxu0 0.0
        %1033 = vmatpush1.xpose.msra.mxu0 0.0
        %1034 = vmatprep.subr.mxu0 0.0
        %1035 = vmatpush1.xpose.msra.mxu0 0.0
        %1036 = vmatprep.subr.mxu0 0.0
        %1037 = vmatpush1.xpose.msra.mxu0 0.0
        %1038 = vmatprep.subr.mxu0 0.0
        %1039 = vmatpush1.xpose.msra.mxu0 0.0
        %1040 = vmatprep.subr.mxu0 0.0
        %1041 = vmatpush1.xpose.msra.mxu0 0.0
        %1042 = vmatprep.subr.mxu0 0.0
        %1043 = vmatpush1.xpose.msra.mxu0 0.0
        %1044 = vmatprep.subr.mxu0 0.0
        %1045 = vmatpush1.xpose.msra.mxu0 0.0
        %1046 = vmatprep.subr.mxu0 0.0
        %1047 = vmatpush1.xpose.msra.mxu0 0.0
        %1048 = vmatprep.subr.mxu0 0.0
        %1049 = vmatpush1.xpose.msra.mxu0 0.0
        %1050 = vmatprep.subr.mxu0 0.0
        %1051 = vmatpush1.xpose.msra.mxu0 0.0
        %1052 = vmatprep.subr.mxu0 0.0
        %1053 = vmatpush1.xpose.msra.mxu0 0.0
        %1054 = vmatprep.subr.mxu0 0.0
        %1055 = vmatpush1.xpose.msra.mxu0 0.0
        %1056 = vmatprep.subr.mxu0 0.0
        %1057 = vmatpush1.xpose.msra.mxu0 0.0
        %1058 = vmatprep.subr.mxu0 0.0
        %1059 = vmatpush1.xpose.msra.mxu0 0.0
        %1060 = vmatprep.subr.mxu0 0.0
        %1061 = vmatpush1.xpose.msra.mxu0 0.0
        %1062 = vmatprep.subr.mxu0 0.0
        %1063 = vmatpush1.xpose.msra.mxu0 0.0
        %1064 = vmatprep.subr.mxu0 0.0
        %1065 = vmatpush1.xpose.msra.mxu0 0.0
        %1066 = vmatprep.subr.mxu0 0.0
        %1067 = vmatpush1.xpose.msra.mxu0 0.0
        %1068 = vmatprep.subr.mxu0 0.0
        %1069 = vmatpush1.xpose.msra.mxu0 0.0
        %1070 = vmatprep.subr.mxu0 0.0
        %1071 = vmatpush1.xpose.msra.mxu0 0.0
        %1072 = vmatprep.mubr.f32.mxu0 0.0
        %1073 = vmatmul.mubr.f32.gmra.mrb[0].mxu0 %v1004
        %v1074 = vpop.f32.mrb[0].mxu0
        %v1075 = vadd.f32 0.0, %v1074
        %v1076 = vpop.f32.mrb[0].mxu0
        %1077 = vdwg.mxu0
        %v1078 = vld [vmem:[#allocation3] sm:$0xff]
        %vm1079 = vcmask 64512
        %v1080 = vsel %vm1079, %v1075, -inf
        %1081 = vmax.xlane.f32.xlu0 %v1080
        %v1082 = vpop.xlane.xlu0 %1081
        %v1083 = vmax.f32 %v1078, %v1082
        %v1084 = vsub.f32 %v1078, %v1083
        %v1085 = vmul.f32 %v1084, 1.442695
        %v1086 = vpow.pop %v1085
        %1088 = vset.pattern.permute.xlu0 0
        %1089 = vperm.xlu0 %1088, %v1083
        %v1090 = vpop.permute.xlu0 %1089
        %v1092 = vsub.f32 %v1075, %v1090
        %v1093 = vmul.f32 %v1092, 1.442695
        %v1094 = vpow.pop %v1093
        %v1095 = vld [vmem:[#allocation4] sm:$0xff]
        %v1096 = vmul.f32 %v1086, %v1095
        %v1097 = vsel %vm1079, %v1094, 0.0
        %1098 = vadd.xlane.f32.xlu0 %v1097
        %v1099 = vpop.xlane.xlu0 %1098
        %v1100 = vadd.f32 %v1096, %v1099
        %vm1101 = vcmask 7168
        %1102 = vst.msk [vmem:[#allocation4] sm:$0xff] %vm1101, %v1100
        %v1103 = vld [vmem:[#allocation5] sm:$0xff]
        %1105 = vset.pattern.permute.xlu0 0
        %1106 = vperm.xlu0 %1105, %v1086
        %v1107 = vpop.permute.xlu0 %1106
        %v1109 = vmul.f32 %v1107, %v1103
        %v1111 = vsel %vm1079, %v1094, 0
        %1113 = vmatprep.subr.mxu0 0.0
        %1114 = vmatpush1.msra.mxu0 %v929
        %1115 = vmatprep.subr.mxu0 0.0
        %1116 = vmatpush1.msra.mxu0 0.0
        %1117 = vmatprep.subr.mxu0 0.0
        %1118 = vmatpush1.msra.mxu0 0.0
        %1119 = vmatprep.subr.mxu0 0.0
        %1120 = vmatpush1.msra.mxu0 0.0
        %1121 = vmatprep.subr.mxu0 0.0
        %1122 = vmatpush1.msra.mxu0 0.0
        %1123 = vmatprep.subr.mxu0 0.0
        %1124 = vmatpush1.msra.mxu0 0.0
        %1125 = vmatprep.subr.mxu0 0.0
        %1126 = vmatpush1.msra.mxu0 0.0
        %1127 = vmatprep.subr.mxu0 0.0
        %1128 = vmatpush1.msra.mxu0 0.0
        %1129 = vmatprep.subr.mxu0 0.0
        %1130 = vmatpush1.msra.mxu0 0.0
        %1131 = vmatprep.subr.mxu0 0.0
        %1132 = vmatpush1.msra.mxu0 0.0
        %1133 = vmatprep.subr.mxu0 0.0
        %1134 = vmatpush1.msra.mxu0 0.0
        %1135 = vmatprep.subr.mxu0 0.0
        %1136 = vmatpush1.msra.mxu0 0.0
        %1137 = vmatprep.subr.mxu0 0.0
        %1138 = vmatpush1.msra.mxu0 0.0
        %1139 = vmatprep.subr.mxu0 0.0
        %1140 = vmatpush1.msra.mxu0 0.0
        %1141 = vmatprep.subr.mxu0 0.0
        %1142 = vmatpush1.msra.mxu0 0.0
        %1143 = vmatprep.subr.mxu0 0.0
        %1144 = vmatpush1.msra.mxu0 0.0
        %1145 = vmatprep.subr.mxu0 0.0
        %1146 = vmatpush1.msra.mxu0 0.0
        %1147 = vmatprep.subr.mxu0 0.0
        %1148 = vmatpush1.msra.mxu0 0.0
        %1149 = vmatprep.subr.mxu0 0.0
        %1150 = vmatpush1.msra.mxu0 0.0
        %1151 = vmatprep.subr.mxu0 0.0
        %1152 = vmatpush1.msra.mxu0 0.0
        %1153 = vmatprep.subr.mxu0 0.0
        %1154 = vmatpush1.msra.mxu0 0.0
        %1155 = vmatprep.subr.mxu0 0.0
        %1156 = vmatpush1.msra.mxu0 0.0
        %1157 = vmatprep.subr.mxu0 0.0
        %1158 = vmatpush1.msra.mxu0 0.0
        %1159 = vmatprep.subr.mxu0 0.0
        %1160 = vmatpush1.msra.mxu0 0.0
        %1161 = vmatprep.subr.mxu0 0.0
        %1162 = vmatpush1.msra.mxu0 0.0
        %1163 = vmatprep.subr.mxu0 0.0
        %1164 = vmatpush1.msra.mxu0 0.0
        %1165 = vmatprep.subr.mxu0 0.0
        %1166 = vmatpush1.msra.mxu0 0.0
        %1167 = vmatprep.subr.mxu0 0.0
        %1168 = vmatpush1.msra.mxu0 0.0
        %1169 = vmatprep.subr.mxu0 0.0
        %1170 = vmatpush1.msra.mxu0 0.0
        %1171 = vmatprep.subr.mxu0 0.0
        %1172 = vmatpush1.msra.mxu0 0.0
        %1173 = vmatprep.subr.mxu0 0.0
        %1174 = vmatpush1.msra.mxu0 0.0
        %1175 = vmatprep.subr.mxu0 0.0
        %1176 = vmatpush1.msra.mxu0 0.0
        %1177 = vmatprep.mubr.f32.mxu0 0.0
        %1178 = vmatmul.mubr.f32.gmra.mrb[0].mxu0 %v1111
        %v1179 = vpop.f32.mrb[0].mxu0
        %v1180 = vadd.f32 0.0, %v1179
        %v1181 = vpop.f32.mrb[0].mxu0
        %1182 = vdwg.mxu0
        %v1183 = vadd.f32 %v1109, %v1180
        %1184 = vst [vmem:[#allocation5] sm:$0xff] %v1183
        %1185 = vst.msk [vmem:[#allocation3] sm:$0xff] %vm1101, %v1083
        %1186 = vmatprep.subr.mxu0 0.0
        %1187 = vmatpush1.xpose.msra.mxu0 %v725
        %1188 = vmatprep.subr.mxu0 0.0
        %1189 = vmatpush1.xpose.msra.mxu0 0.0
        %1190 = vmatprep.subr.mxu0 0.0
        %1191 = vmatpush1.xpose.msra.mxu0 0.0
        %1192 = vmatprep.subr.mxu0 0.0
        %1193 = vmatpush1.xpose.msra.mxu0 0.0
        %1194 = vmatprep.subr.mxu0 0.0
        %1195 = vmatpush1.xpose.msra.mxu0 0.0
        %1196 = vmatprep.subr.mxu0 0.0
        %1197 = vmatpush1.xpose.msra.mxu0 0.0
        %1198 = vmatprep.subr.mxu0 0.0
        %1199 = vmatpush1.xpose.msra.mxu0 0.0
        %1200 = vmatprep.subr.mxu0 0.0
        %1201 = vmatpush1.xpose.msra.mxu0 0.0
        %1202 = vmatprep.subr.mxu0 0.0
        %1203 = vmatpush1.xpose.msra.mxu0 0.0
        %1204 = vmatprep.subr.mxu0 0.0
        %1205 = vmatpush1.xpose.msra.mxu0 0.0
        %1206 = vmatprep.subr.mxu0 0.0
        %1207 = vmatpush1.xpose.msra.mxu0 0.0
        %1208 = vmatprep.subr.mxu0 0.0
        %1209 = vmatpush1.xpose.msra.mxu0 0.0
        %1210 = vmatprep.subr.mxu0 0.0
        %1211 = vmatpush1.xpose.msra.mxu0 0.0
        %1212 = vmatprep.subr.mxu0 0.0
        %1213 = vmatpush1.xpose.msra.mxu0 0.0
        %1214 = vmatprep.subr.mxu0 0.0
        %1215 = vmatpush1.xpose.msra.mxu0 0.0
        %1216 = vmatprep.subr.mxu0 0.0
        %1217 = vmatpush1.xpose.msra.mxu0 0.0
        %1218 = vmatprep.subr.mxu0 0.0
        %1219 = vmatpush1.xpose.msra.mxu0 0.0
        %1220 = vmatprep.subr.mxu0 0.0
        %1221 = vmatpush1.xpose.msra.mxu0 0.0
        %1222 = vmatprep.subr.mxu0 0.0
        %1223 = vmatpush1.xpose.msra.mxu0 0.0
        %1224 = vmatprep.subr.mxu0 0.0
        %1225 = vmatpush1.xpose.msra.mxu0 0.0
        %1226 = vmatprep.subr.mxu0 0.0
        %1227 = vmatpush1.xpose.msra.mxu0 0.0
        %1228 = vmatprep.subr.mxu0 0.0
        %1229 = vmatpush1.xpose.msra.mxu0 0.0
        %1230 = vmatprep.subr.mxu0 0.0
        %1231 = vmatpush1.xpose.msra.mxu0 0.0
        %1232 = vmatprep.subr.mxu0 0.0
        %1233 = vmatpush1.xpose.msra.mxu0 0.0
        %1234 = vmatprep.subr.mxu0 0.0
        %1235 = vmatpush1.xpose.msra.mxu0 0.0
        %1236 = vmatprep.subr.mxu0 0.0
        %1237 = vmatpush1.xpose.msra.mxu0 0.0
        %1238 = vmatprep.subr.mxu0 0.0
        %1239 = vmatpush1.xpose.msra.mxu0 0.0
        %1240 = vmatprep.subr.mxu0 0.0
        %1241 = vmatpush1.xpose.msra.mxu0 0.0
        %1242 = vmatprep.subr.mxu0 0.0
        %1243 = vmatpush1.xpose.msra.mxu0 0.0
        %1244 = vmatprep.subr.mxu0 0.0
        %1245 = vmatpush1.xpose.msra.mxu0 0.0
        %1246 = vmatprep.subr.mxu0 0.0
        %1247 = vmatpush1.xpose.msra.mxu0 0.0
        %1248 = vmatprep.subr.mxu0 0.0
        %1249 = vmatpush1.xpose.msra.mxu0 0.0
        %1250 = vmatprep.mubr.f32.mxu0 0.0
        %1251 = vmatmul.mubr.f32.gmra.mrb[0].mxu0 %v1005
        %v1252 = vpop.f32.mrb[0].mxu0
        %v1253 = vadd.f32 0.0, %v1252
        %v1254 = vpop.f32.mrb[0].mxu0
        %1255 = vdwg.mxu0
        %s1256 = scalar_lea.vmem [#allocation3], 8
        %v1257 = vld [vmem:[%s1256] sm:$0xff]
        %v1258 = vsel %vm1079, %v1253, -inf
        %1259 = vmax.xlane.f32.xlu0 %v1258
        %v1260 = vpop.xlane.xlu0 %1259
        %v1261 = vmax.f32 %v1257, %v1260
        %v1262 = vsub.f32 %v1257, %v1261
        %v1263 = vmul.f32 %v1262, 1.442695
        %v1264 = vpow.pop %v1263
        %1266 = vset.pattern.permute.xlu0 0
        %1267 = vperm.xlu0 %1266, %v1261
        %v1268 = vpop.permute.xlu0 %1267
        %v1270 = vsub.f32 %v1253, %v1268
        %v1271 = vmul.f32 %v1270, 1.442695
        %v1272 = vpow.pop %v1271
        %s1273 = scalar_lea.vmem [#allocation4], 8
        %v1274 = vld [vmem:[%s1273] sm:$0xff]
        %v1275 = vmul.f32 %v1264, %v1274
        %v1276 = vsel %vm1079, %v1272, 0.0
        %1277 = vadd.xlane.f32.xlu0 %v1276
        %v1278 = vpop.xlane.xlu0 %1277
        %v1279 = vadd.f32 %v1275, %v1278
        %1280 = vst.msk [vmem:[%s1273] sm:$0xff] %vm1101, %v1279
        %s1281 = scalar_lea.vmem [#allocation5], 8
        %v1282 = vld [vmem:[%s1281] sm:$0xff]
        %1284 = vset.pattern.permute.xlu0 0
        %1285 = vperm.xlu0 %1284, %v1264
        %v1286 = vpop.permute.xlu0 %1285
        %v1288 = vmul.f32 %v1286, %v1282
        %v1290 = vsel %vm1079, %v1272, 0
        %1292 = vmatprep.subr.mxu0 0.0
        %1293 = vmatpush1.msra.mxu0 %v931
        %1294 = vmatprep.subr.mxu0 0.0
        %1295 = vmatpush1.msra.mxu0 0.0
        %1296 = vmatprep.subr.mxu0 0.0
        %1297 = vmatpush1.msra.mxu0 0.0
        %1298 = vmatprep.subr.mxu0 0.0
        %1299 = vmatpush1.msra.mxu0 0.0
        %1300 = vmatprep.subr.mxu0 0.0
        %1301 = vmatpush1.msra.mxu0 0.0
        %1302 = vmatprep.subr.mxu0 0.0
        %1303 = vmatpush1.msra.mxu0 0.0
        %1304 = vmatprep.subr.mxu0 0.0
        %1305 = vmatpush1.msra.mxu0 0.0
        %1306 = vmatprep.subr.mxu0 0.0
        %1307 = vmatpush1.msra.mxu0 0.0
        %1308 = vmatprep.subr.mxu0 0.0
        %1309 = vmatpush1.msra.mxu0 0.0
        %1310 = vmatprep.subr.mxu0 0.0
        %1311 = vmatpush1.msra.mxu0 0.0
        %1312 = vmatprep.subr.mxu0 0.0
        %1313 = vmatpush1.msra.mxu0 0.0
        %1314 = vmatprep.subr.mxu0 0.0
        %1315 = vmatpush1.msra.mxu0 0.0
        %1316 = vmatprep.subr.mxu0 0.0
        %1317 = vmatpush1.msra.mxu0 0.0
        %1318 = vmatprep.subr.mxu0 0.0
        %1319 = vmatpush1.msra.mxu0 0.0
        %1320 = vmatprep.subr.mxu0 0.0
        %1321 = vmatpush1.msra.mxu0 0.0
        %1322 = vmatprep.subr.mxu0 0.0
        %1323 = vmatpush1.msra.mxu0 0.0
        %1324 = vmatprep.subr.mxu0 0.0
        %1325 = vmatpush1.msra.mxu0 0.0
        %1326 = vmatprep.subr.mxu0 0.0
        %1327 = vmatpush1.msra.mxu0 0.0
        %1328 = vmatprep.subr.mxu0 0.0
        %1329 = vmatpush1.msra.mxu0 0.0
        %1330 = vmatprep.subr.mxu0 0.0
        %1331 = vmatpush1.msra.mxu0 0.0
        %1332 = vmatprep.subr.mxu0 0.0
        %1333 = vmatpush1.msra.mxu0 0.0
        %1334 = vmatprep.subr.mxu0 0.0
        %1335 = vmatpush1.msra.mxu0 0.0
        %1336 = vmatprep.subr.mxu0 0.0
        %1337 = vmatpush1.msra.mxu0 0.0
        %1338 = vmatprep.subr.mxu0 0.0
        %1339 = vmatpush1.msra.mxu0 0.0
        %1340 = vmatprep.subr.mxu0 0.0
        %1341 = vmatpush1.msra.mxu0 0.0
        %1342 = vmatprep.subr.mxu0 0.0
        %1343 = vmatpush1.msra.mxu0 0.0
        %1344 = vmatprep.subr.mxu0 0.0
        %1345 = vmatpush1.msra.mxu0 0.0
        %1346 = vmatprep.subr.mxu0 0.0
        %1347 = vmatpush1.msra.mxu0 0.0
        %1348 = vmatprep.subr.mxu0 0.0
        %1349 = vmatpush1.msra.mxu0 0.0
        %1350 = vmatprep.subr.mxu0 0.0
        %1351 = vmatpush1.msra.mxu0 0.0
        %1352 = vmatprep.subr.mxu0 0.0
        %1353 = vmatpush1.msra.mxu0 0.0
        %1354 = vmatprep.subr.mxu0 0.0
        %1355 = vmatpush1.msra.mxu0 0.0
        %1356 = vmatprep.mubr.f32.mxu0 0.0
        %1357 = vmatmul.mubr.f32.gmra.mrb[0].mxu0 %v1290
        %v1358 = vpop.f32.mrb[0].mxu0
        %v1359 = vadd.f32 0.0, %v1358
        %v1360 = vpop.f32.mrb[0].mxu0
        %1361 = vdwg.mxu0
        %v1362 = vadd.f32 %v1288, %v1359
        %1363 = vst [vmem:[%s1281] sm:$0xff] %v1362
        %1364 = vst.msk [vmem:[%s1256] sm:$0xff] %vm1101, %v1261
        %1365 = vmatprep.subr.mxu0 0.0
        %1366 = vmatpush1.xpose.msra.mxu0 %v794
        %1367 = vmatprep.subr.mxu0 0.0
        %1368 = vmatpush1.xpose.msra.mxu0 0.0
        %1369 = vmatprep.subr.mxu0 0.0
        %1370 = vmatpush1.xpose.msra.mxu0 0.0
        %1371 = vmatprep.subr.mxu0 0.0
        %1372 = vmatpush1.xpose.msra.mxu0 0.0
        %1373 = vmatprep.subr.mxu0 0.0
        %1374 = vmatpush1.xpose.msra.mxu0 0.0
        %1375 = vmatprep.subr.mxu0 0.0
        %1376 = vmatpush1.xpose.msra.mxu0 0.0
        %1377 = vmatprep.subr.mxu0 0.0
        %1378 = vmatpush1.xpose.msra.mxu0 0.0
        %1379 = vmatprep.subr.mxu0 0.0
        %1380 = vmatpush1.xpose.msra.mxu0 0.0
        %1381 = vmatprep.subr.mxu0 0.0
        %1382 = vmatpush1.xpose.msra.mxu0 0.0
        %1383 = vmatprep.subr.mxu0 0.0
        %1384 = vmatpush1.xpose.msra.mxu0 0.0
        %1385 = vmatprep.subr.mxu0 0.0
        %1386 = vmatpush1.xpose.msra.mxu0 0.0
        %1387 = vmatprep.subr.mxu0 0.0
        %1388 = vmatpush1.xpose.msra.mxu0 0.0
        %1389 = vmatprep.subr.mxu0 0.0
        %1390 = vmatpush1.xpose.msra.mxu0 0.0
        %1391 = vmatprep.subr.mxu0 0.0
        %1392 = vmatpush1.xpose.msra.mxu0 0.0
        %1393 = vmatprep.subr.mxu0 0.0
        %1394 = vmatpush1.xpose.msra.mxu0 0.0
        %1395 = vmatprep.subr.mxu0 0.0
        %1396 = vmatpush1.xpose.msra.mxu0 0.0
        %1397 = vmatprep.subr.mxu0 0.0
        %1398 = vmatpush1.xpose.msra.mxu0 0.0
        %1399 = vmatprep.subr.mxu0 0.0
        %1400 = vmatpush1.xpose.msra.mxu0 0.0
        %1401 = vmatprep.subr.mxu0 0.0
        %1402 = vmatpush1.xpose.msra.mxu0 0.0
        %1403 = vmatprep.subr.mxu0 0.0
        %1404 = vmatpush1.xpose.msra.mxu0 0.0
        %1405 = vmatprep.subr.mxu0 0.0
        %1406 = vmatpush1.xpose.msra.mxu0 0.0
        %1407 = vmatprep.subr.mxu0 0.0
        %1408 = vmatpush1.xpose.msra.mxu0 0.0
        %1409 = vmatprep.subr.mxu0 0.0
        %1410 = vmatpush1.xpose.msra.mxu0 0.0
        %1411 = vmatprep.subr.mxu0 0.0
        %1412 = vmatpush1.xpose.msra.mxu0 0.0
        %1413 = vmatprep.subr.mxu0 0.0
        %1414 = vmatpush1.xpose.msra.mxu0 0.0
        %1415 = vmatprep.subr.mxu0 0.0
        %1416 = vmatpush1.xpose.msra.mxu0 0.0
        %1417 = vmatprep.subr.mxu0 0.0
        %1418 = vmatpush1.xpose.msra.mxu0 0.0
        %1419 = vmatprep.subr.mxu0 0.0
        %1420 = vmatpush1.xpose.msra.mxu0 0.0
        %1421 = vmatprep.subr.mxu0 0.0
        %1422 = vmatpush1.xpose.msra.mxu0 0.0
        %1423 = vmatprep.subr.mxu0 0.0
        %1424 = vmatpush1.xpose.msra.mxu0 0.0
        %1425 = vmatprep.subr.mxu0 0.0
        %1426 = vmatpush1.xpose.msra.mxu0 0.0
        %1427 = vmatprep.subr.mxu0 0.0
        %1428 = vmatpush1.xpose.msra.mxu0 0.0
        %1429 = vmatprep.mubr.f32.mxu0 0.0
        %1430 = vmatmul.mubr.f32.gmra.mrb[0].mxu0 %v1006
        %v1431 = vpop.f32.mrb[0].mxu0
        %v1432 = vadd.f32 0.0, %v1431
        %v1433 = vpop.f32.mrb[0].mxu0
        %1434 = vdwg.mxu0
        %s1435 = scalar_lea.vmem [#allocation3], 16
        %v1436 = vld [vmem:[%s1435] sm:$0xff]
        %v1437 = vsel %vm1079, %v1432, -inf
        %1438 = vmax.xlane.f32.xlu0 %v1437
        %v1439 = vpop.xlane.xlu0 %1438
        %v1440 = vmax.f32 %v1436, %v1439
        %v1441 = vsub.f32 %v1436, %v1440
        %v1442 = vmul.f32 %v1441, 1.442695
        %v1443 = vpow.pop %v1442
        %1445 = vset.pattern.permute.xlu0 0
        %1446 = vperm.xlu0 %1445, %v1440
        %v1447 = vpop.permute.xlu0 %1446
        %v1449 = vsub.f32 %v1432, %v1447
        %v1450 = vmul.f32 %v1449, 1.442695
        %v1451 = vpow.pop %v1450
        %s1452 = scalar_lea.vmem [#allocation4], 16
        %v1453 = vld [vmem:[%s1452] sm:$0xff]
        %v1454 = vmul.f32 %v1443, %v1453
        %v1455 = vsel %vm1079, %v1451, 0.0
        %1456 = vadd.xlane.f32.xlu0 %v1455
        %v1457 = vpop.xlane.xlu0 %1456
        %v1458 = vadd.f32 %v1454, %v1457
        %1459 = vst.msk [vmem:[%s1452] sm:$0xff] %vm1101, %v1458
        %s1460 = scalar_lea.vmem [#allocation5], 16
        %v1461 = vld [vmem:[%s1460] sm:$0xff]
        %1463 = vset.pattern.permute.xlu0 0
        %1464 = vperm.xlu0 %1463, %v1443
        %v1465 = vpop.permute.xlu0 %1464
        %v1467 = vmul.f32 %v1465, %v1461
        %v1469 = vsel %vm1079, %v1451, 0
        %1471 = vmatprep.subr.mxu0 0.0
        %1472 = vmatpush1.msra.mxu0 %v1000
        %1473 = vmatprep.subr.mxu0 0.0
        %1474 = vmatpush1.msra.mxu0 0.0
        %1475 = vmatprep.subr.mxu0 0.0
        %1476 = vmatpush1.msra.mxu0 0.0
        %1477 = vmatprep.subr.mxu0 0.0
        %1478 = vmatpush1.msra.mxu0 0.0
        %1479 = vmatprep.subr.mxu0 0.0
        %1480 = vmatpush1.msra.mxu0 0.0
        %1481 = vmatprep.subr.mxu0 0.0
        %1482 = vmatpush1.msra.mxu0 0.0
        %1483 = vmatprep.subr.mxu0 0.0
        %1484 = vmatpush1.msra.mxu0 0.0
        %1485 = vmatprep.subr.mxu0 0.0
        %1486 = vmatpush1.msra.mxu0 0.0
        %1487 = vmatprep.subr.mxu0 0.0
        %1488 = vmatpush1.msra.mxu0 0.0
        %1489 = vmatprep.subr.mxu0 0.0
        %1490 = vmatpush1.msra.mxu0 0.0
        %1491 = vmatprep.subr.mxu0 0.0
        %1492 = vmatpush1.msra.mxu0 0.0
        %1493 = vmatprep.subr.mxu0 0.0
        %1494 = vmatpush1.msra.mxu0 0.0
        %1495 = vmatprep.subr.mxu0 0.0
        %1496 = vmatpush1.msra.mxu0 0.0
        %1497 = vmatprep.subr.mxu0 0.0
        %1498 = vmatpush1.msra.mxu0 0.0
        %1499 = vmatprep.subr.mxu0 0.0
        %1500 = vmatpush1.msra.mxu0 0.0
        %1501 = vmatprep.subr.mxu0 0.0
        %1502 = vmatpush1.msra.mxu0 0.0
        %1503 = vmatprep.subr.mxu0 0.0
        %1504 = vmatpush1.msra.mxu0 0.0
        %1505 = vmatprep.subr.mxu0 0.0
        %1506 = vmatpush1.msra.mxu0 0.0
        %1507 = vmatprep.subr.mxu0 0.0
        %1508 = vmatpush1.msra.mxu0 0.0
        %1509 = vmatprep.subr.mxu0 0.0
        %1510 = vmatpush1.msra.mxu0 0.0
        %1511 = vmatprep.subr.mxu0 0.0
        %1512 = vmatpush1.msra.mxu0 0.0
        %1513 = vmatprep.subr.mxu0 0.0
        %1514 = vmatpush1.msra.mxu0 0.0
        %1515 = vmatprep.subr.mxu0 0.0
        %1516 = vmatpush1.msra.mxu0 0.0
        %1517 = vmatprep.subr.mxu0 0.0
        %1518 = vmatpush1.msra.mxu0 0.0
        %1519 = vmatprep.subr.mxu0 0.0
        %1520 = vmatpush1.msra.mxu0 0.0
        %1521 = vmatprep.subr.mxu0 0.0
        %1522 = vmatpush1.msra.mxu0 0.0
        %1523 = vmatprep.subr.mxu0 0.0
        %1524 = vmatpush1.msra.mxu0 0.0
        %1525 = vmatprep.subr.mxu0 0.0
        %1526 = vmatpush1.msra.mxu0 0.0
        %1527 = vmatprep.subr.mxu0 0.0
        %1528 = vmatpush1.msra.mxu0 0.0
        %1529 = vmatprep.subr.mxu0 0.0
        %1530 = vmatpush1.msra.mxu0 0.0
        %1531 = vmatprep.subr.mxu0 0.0
        %1532 = vmatpush1.msra.mxu0 0.0
        %1533 = vmatprep.subr.mxu0 0.0
        %1534 = vmatpush1.msra.mxu0 0.0
        %1535 = vmatprep.mubr.f32.mxu0 0.0
        %1536 = vmatmul.mubr.f32.gmra.mrb[0].mxu0 %v1469
        %v1537 = vpop.f32.mrb[0].mxu0
        %v1538 = vadd.f32 0.0, %v1537
        %v1539 = vpop.f32.mrb[0].mxu0
        %1540 = vdwg.mxu0
        %v1541 = vadd.f32 %v1467, %v1538
        %1542 = vst [vmem:[%s1460] sm:$0xff] %v1541
        %1543 = vst.msk [vmem:[%s1435] sm:$0xff] %vm1101, %v1440
        %1544 = vmatprep.subr.mxu0 0.0
        %1545 = vmatpush1.xpose.msra.mxu0 %v796
        %1546 = vmatprep.subr.mxu0 0.0
        %1547 = vmatpush1.xpose.msra.mxu0 0.0
        %1548 = vmatprep.subr.mxu0 0.0
        %1549 = vmatpush1.xpose.msra.mxu0 0.0
        %1550 = vmatprep.subr.mxu0 0.0
        %1551 = vmatpush1.xpose.msra.mxu0 0.0
        %1552 = vmatprep.subr.mxu0 0.0
        %1553 = vmatpush1.xpose.msra.mxu0 0.0
        %1554 = vmatprep.subr.mxu0 0.0
        %1555 = vmatpush1.xpose.msra.mxu0 0.0
        %1556 = vmatprep.subr.mxu0 0.0
        %1557 = vmatpush1.xpose.msra.mxu0 0.0
        %1558 = vmatprep.subr.mxu0 0.0
        %1559 = vmatpush1.xpose.msra.mxu0 0.0
        %1560 = vmatprep.subr.mxu0 0.0
        %1561 = vmatpush1.xpose.msra.mxu0 0.0
        %1562 = vmatprep.subr.mxu0 0.0
        %1563 = vmatpush1.xpose.msra.mxu0 0.0
        %1564 = vmatprep.subr.mxu0 0.0
        %1565 = vmatpush1.xpose.msra.mxu0 0.0
        %1566 = vmatprep.subr.mxu0 0.0
        %1567 = vmatpush1.xpose.msra.mxu0 0.0
        %1568 = vmatprep.subr.mxu0 0.0
        %1569 = vmatpush1.xpose.msra.mxu0 0.0
        %1570 = vmatprep.subr.mxu0 0.0
        %1571 = vmatpush1.xpose.msra.mxu0 0.0
        %1572 = vmatprep.subr.mxu0 0.0
        %1573 = vmatpush1.xpose.msra.mxu0 0.0
        %1574 = vmatprep.subr.mxu0 0.0
        %1575 = vmatpush1.xpose.msra.mxu0 0.0
        %1576 = vmatprep.subr.mxu0 0.0
        %1577 = vmatpush1.xpose.msra.mxu0 0.0
        %1578 = vmatprep.subr.mxu0 0.0
        %1579 = vmatpush1.xpose.msra.mxu0 0.0
        %1580 = vmatprep.subr.mxu0 0.0
        %1581 = vmatpush1.xpose.msra.mxu0 0.0
        %1582 = vmatprep.subr.mxu0 0.0
        %1583 = vmatpush1.xpose.msra.mxu0 0.0
        %1584 = vmatprep.subr.mxu0 0.0
        %1585 = vmatpush1.xpose.msra.mxu0 0.0
        %1586 = vmatprep.subr.mxu0 0.0
        %1587 = vmatpush1.xpose.msra.mxu0 0.0
        %1588 = vmatprep.subr.mxu0 0.0
        %1589 = vmatpush1.xpose.msra.mxu0 0.0
        %1590 = vmatprep.subr.mxu0 0.0
        %1591 = vmatpush1.xpose.msra.mxu0 0.0
        %1592 = vmatprep.subr.mxu0 0.0
        %1593 = vmatpush1.xpose.msra.mxu0 0.0
        %1594 = vmatprep.subr.mxu0 0.0
        %1595 = vmatpush1.xpose.msra.mxu0 0.0
        %1596 = vmatprep.subr.mxu0 0.0
        %1597 = vmatpush1.xpose.msra.mxu0 0.0
        %1598 = vmatprep.subr.mxu0 0.0
        %1599 = vmatpush1.xpose.msra.mxu0 0.0
        %1600 = vmatprep.subr.mxu0 0.0
        %1601 = vmatpush1.xpose.msra.mxu0 0.0
        %1602 = vmatprep.subr.mxu0 0.0
        %1603 = vmatpush1.xpose.msra.mxu0 0.0
        %1604 = vmatprep.subr.mxu0 0.0
        %1605 = vmatpush1.xpose.msra.mxu0 0.0
        %1606 = vmatprep.subr.mxu0 0.0
        %1607 = vmatpush1.xpose.msra.mxu0 0.0
        %1608 = vmatprep.mubr.f32.mxu0 0.0
        %1609 = vmatmul.mubr.f32.gmra.mrb[0].mxu0 %v1007
        %v1610 = vpop.f32.mrb[0].mxu0
        %v1611 = vadd.f32 0.0, %v1610
        %v1612 = vpop.f32.mrb[0].mxu0
        %1613 = vdwg.mxu0
        %s1614 = scalar_lea.vmem [#allocation3], 24
        %v1615 = vld [vmem:[%s1614] sm:$0xff]
        %v1616 = vsel %vm1079, %v1611, -inf
        %1617 = vmax.xlane.f32.xlu0 %v1616
        %v1618 = vpop.xlane.xlu0 %1617
        %v1619 = vmax.f32 %v1615, %v1618
        %v1620 = vsub.f32 %v1615, %v1619
        %v1621 = vmul.f32 %v1620, 1.442695
        %v1622 = vpow.pop %v1621
        %1624 = vset.pattern.permute.xlu0 0
        %1625 = vperm.xlu0 %1624, %v1619
        %v1626 = vpop.permute.xlu0 %1625
        %v1628 = vsub.f32 %v1611, %v1626
        %v1629 = vmul.f32 %v1628, 1.442695
        %v1630 = vpow.pop %v1629
        %s1631 = scalar_lea.vmem [#allocation4], 24
        %v1632 = vld [vmem:[%s1631] sm:$0xff]
        %v1633 = vmul.f32 %v1622, %v1632
        %v1634 = vsel %vm1079, %v1630, 0.0
        %1635 = vadd.xlane.f32.xlu0 %v1634
        %v1636 = vpop.xlane.xlu0 %1635
        %v1637 = vadd.f32 %v1633, %v1636
        %1638 = vst.msk [vmem:[%s1631] sm:$0xff] %vm1101, %v1637
        %s1639 = scalar_lea.vmem [#allocation5], 24
        %v1640 = vld [vmem:[%s1639] sm:$0xff]
        %1642 = vset.pattern.permute.xlu0 0
        %1643 = vperm.xlu0 %1642, %v1622
        %v1644 = vpop.permute.xlu0 %1643
        %v1646 = vmul.f32 %v1644, %v1640
        %v1648 = vsel %vm1079, %v1630, 0
        %1650 = vmatprep.subr.mxu0 0.0
        %1651 = vmatpush1.msra.mxu0 %v1002
        %1652 = vmatprep.subr.mxu0 0.0
        %1653 = vmatpush1.msra.mxu0 0.0
        %1654 = vmatprep.subr.mxu0 0.0
        %1655 = vmatpush1.msra.mxu0 0.0
        %1656 = vmatprep.subr.mxu0 0.0
        %1657 = vmatpush1.msra.mxu0 0.0
        %1658 = vmatprep.subr.mxu0 0.0
        %1659 = vmatpush1.msra.mxu0 0.0
        %1660 = vmatprep.subr.mxu0 0.0
        %1661 = vmatpush1.msra.mxu0 0.0
        %1662 = vmatprep.subr.mxu0 0.0
        %1663 = vmatpush1.msra.mxu0 0.0
        %1664 = vmatprep.subr.mxu0 0.0
        %1665 = vmatpush1.msra.mxu0 0.0
        %1666 = vmatprep.subr.mxu0 0.0
        %1667 = vmatpush1.msra.mxu0 0.0
        %1668 = vmatprep.subr.mxu0 0.0
        %1669 = vmatpush1.msra.mxu0 0.0
        %1670 = vmatprep.subr.mxu0 0.0
        %1671 = vmatpush1.msra.mxu0 0.0
        %1672 = vmatprep.subr.mxu0 0.0
        %1673 = vmatpush1.msra.mxu0 0.0
        %1674 = vmatprep.subr.mxu0 0.0
        %1675 = vmatpush1.msra.mxu0 0.0
        %1676 = vmatprep.subr.mxu0 0.0
        %1677 = vmatpush1.msra.mxu0 0.0
        %1678 = vmatprep.subr.mxu0 0.0
        %1679 = vmatpush1.msra.mxu0 0.0
        %1680 = vmatprep.subr.mxu0 0.0
        %1681 = vmatpush1.msra.mxu0 0.0
        %1682 = vmatprep.subr.mxu0 0.0
        %1683 = vmatpush1.msra.mxu0 0.0
        %1684 = vmatprep.subr.mxu0 0.0
        %1685 = vmatpush1.msra.mxu0 0.0
        %1686 = vmatprep.subr.mxu0 0.0
        %1687 = vmatpush1.msra.mxu0 0.0
        %1688 = vmatprep.subr.mxu0 0.0
        %1689 = vmatpush1.msra.mxu0 0.0
        %1690 = vmatprep.subr.mxu0 0.0
        %1691 = vmatpush1.msra.mxu0 0.0
        %1692 = vmatprep.subr.mxu0 0.0
        %1693 = vmatpush1.msra.mxu0 0.0
        %1694 = vmatprep.subr.mxu0 0.0
        %1695 = vmatpush1.msra.mxu0 0.0
        %1696 = vmatprep.subr.mxu0 0.0
        %1697 = vmatpush1.msra.mxu0 0.0
        %1698 = vmatprep.subr.mxu0 0.0
        %1699 = vmatpush1.msra.mxu0 0.0
        %1700 = vmatprep.subr.mxu0 0.0
        %1701 = vmatpush1.msra.mxu0 0.0
        %1702 = vmatprep.subr.mxu0 0.0
        %1703 = vmatpush1.msra.mxu0 0.0
        %1704 = vmatprep.subr.mxu0 0.0
        %1705 = vmatpush1.msra.mxu0 0.0
        %1706 = vmatprep.subr.mxu0 0.0
        %1707 = vmatpush1.msra.mxu0 0.0
        %1708 = vmatprep.subr.mxu0 0.0
        %1709 = vmatpush1.msra.mxu0 0.0
        %1710 = vmatprep.subr.mxu0 0.0
        %1711 = vmatpush1.msra.mxu0 0.0
        %1712 = vmatprep.subr.mxu0 0.0
        %1713 = vmatpush1.msra.mxu0 0.0
        %1714 = vmatprep.mubr.f32.mxu0 0.0
        %1715 = vmatmul.mubr.f32.gmra.mrb[0].mxu0 %v1648
        %v1716 = vpop.f32.mrb[0].mxu0
        %v1717 = vadd.f32 0.0, %v1716
        %v1718 = vpop.f32.mrb[0].mxu0
        %1719 = vdwg.mxu0
        %v1720 = vadd.f32 %v1646, %v1717
        %1721 = vst [vmem:[%s1639] sm:$0xff] %v1720
        %1722 = vst.msk [vmem:[%s1614] sm:$0xff] %vm1101, %v1619
        // Predicated region
        $region73: #{_lambda_.1} parent=43 // pred_check
          %p1723 = pneg %p359
        $region74: #{_lambda_.1} parent=43 // pred_check_branch
          %1725 = sbr.rel (%p1723) target = $region76
        $region75: #{_lambda_.1} parent=43 // pred_region
          %v1726 = vld [vmem:[#allocation14] sm:$0xff]
          %v1727 = vld [vmem:[#allocation14 + $0x8] sm:$0xff]
          %v1728 = vld [vmem:[#allocation14 + $0x10] sm:$0xff]
          %v1729 = vld [vmem:[#allocation14 + $0x18] sm:$0xff]
          %v1730 = vld [vmem:[#allocation14 + $0x20] sm:$0xff]
          %v1731 = vld [vmem:[#allocation14 + $0x28] sm:$0xff]
          %v1732 = vld [vmem:[#allocation14 + $0x30] sm:$0xff]
          %v1733 = vld [vmem:[#allocation14 + $0x38] sm:$0xff]
          %v1734 = vld [vmem:[#allocation14 + $0x40] sm:$0xff]
          %v1735 = vld [vmem:[#allocation14 + $0x48] sm:$0xff]
          %v1736 = vld [vmem:[#allocation14 + $0x50] sm:$0xff]
          %v1737 = vld [vmem:[#allocation14 + $0x58] sm:$0xff]
          %v1738 = vld [vmem:[#allocation14 + $0x60] sm:$0xff]
          %v1739 = vld [vmem:[#allocation14 + $0x68] sm:$0xff]
          %v1740 = vld [vmem:[#allocation14 + $0x70] sm:$0xff]
          %v1741 = vld [vmem:[#allocation14 + $0x78] sm:$0xff]
          %v1742 = vld [vmem:[#allocation14 + $0x80] sm:$0xff]
          %v1743 = vld [vmem:[#allocation14 + $0x88] sm:$0xff]
          %v1744 = vld [vmem:[#allocation14 + $0x90] sm:$0xff]
          %v1745 = vld [vmem:[#allocation14 + $0x98] sm:$0xff]
          %v1746 = vld [vmem:[#allocation14 + $0xa0] sm:$0xff]
          %v1747 = vld [vmem:[#allocation14 + $0xa8] sm:$0xff]
          %v1748 = vld [vmem:[#allocation14 + $0xb0] sm:$0xff]
          %v1749 = vld [vmem:[#allocation14 + $0xb8] sm:$0xff]
          %v1750 = vld [vmem:[#allocation14 + $0xc0] sm:$0xff]
          %v1751 = vld [vmem:[#allocation14 + $0xc8] sm:$0xff]
          %v1752 = vld [vmem:[#allocation14 + $0xd0] sm:$0xff]
          %v1753 = vld [vmem:[#allocation14 + $0xd8] sm:$0xff]
          %v1754 = vld [vmem:[#allocation14 + $0xe0] sm:$0xff]
          %v1755 = vld [vmem:[#allocation14 + $0xe8] sm:$0xff]
          %v1756 = vld [vmem:[#allocation14 + $0xf0] sm:$0xff]
          %v1757 = vld [vmem:[#allocation14 + $0xf8] sm:$0xff]
          %v1758 = vld [vmem:[#allocation14 + $0x100] sm:$0xff]
          %v1759 = vld [vmem:[#allocation14 + $0x108] sm:$0xff]
          %v1760 = vld [vmem:[#allocation14 + $0x110] sm:$0xff]
          %v1761 = vld [vmem:[#allocation14 + $0x118] sm:$0xff]
          %v1762 = vld [vmem:[#allocation14 + $0x120] sm:$0xff]
          %v1763 = vld [vmem:[#allocation14 + $0x128] sm:$0xff]
          %v1764 = vld [vmem:[#allocation14 + $0x130] sm:$0xff]
          %v1765 = vld [vmem:[#allocation14 + $0x138] sm:$0xff]
          %v1766 = vld [vmem:[#allocation14 + $0x140] sm:$0xff]
          %v1767 = vld [vmem:[#allocation14 + $0x148] sm:$0xff]
          %v1768 = vld [vmem:[#allocation14 + $0x150] sm:$0xff]
          %v1769 = vld [vmem:[#allocation14 + $0x158] sm:$0xff]
          %v1770 = vld [vmem:[#allocation14 + $0x160] sm:$0xff]
          %v1771 = vld [vmem:[#allocation14 + $0x168] sm:$0xff]
          %v1772 = vld [vmem:[#allocation14 + $0x170] sm:$0xff]
          %v1773 = vld [vmem:[#allocation14 + $0x178] sm:$0xff]
          %v1774 = vld [vmem:[#allocation14 + $0x180] sm:$0xff]
          %v1775 = vld [vmem:[#allocation14 + $0x188] sm:$0xff]
          %v1776 = vld [vmem:[#allocation14 + $0x190] sm:$0xff]
          %v1777 = vld [vmem:[#allocation14 + $0x198] sm:$0xff]
          %v1778 = vld [vmem:[#allocation14 + $0x1a0] sm:$0xff]
          %v1779 = vld [vmem:[#allocation14 + $0x1a8] sm:$0xff]
          %v1780 = vld [vmem:[#allocation14 + $0x1b0] sm:$0xff]
          %v1781 = vld [vmem:[#allocation14 + $0x1b8] sm:$0xff]
          %v1782 = vld [vmem:[#allocation14 + $0x1c0] sm:$0xff]
          %v1783 = vld [vmem:[#allocation14 + $0x1c8] sm:$0xff]
          %v1784 = vld [vmem:[#allocation14 + $0x1d0] sm:$0xff]
          %v1785 = vld [vmem:[#allocation14 + $0x1d8] sm:$0xff]
          %v1786 = vld [vmem:[#allocation14 + $0x1e0] sm:$0xff]
          %v1787 = vld [vmem:[#allocation14 + $0x1e8] sm:$0xff]
          %v1788 = vld [vmem:[#allocation14 + $0x1f0] sm:$0xff]
          %v1789 = vld [vmem:[#allocation14 + $0x1f8] sm:$0xff]
          %v1790 = vld [vmem:[#allocation15] sm:$0x1]
          %v1792 = vlaneseq
          %v1793 = vshrl.u32 %v1792, 7
          %v1794 = vsub.s32 0, %v1793
          %v1795 = vrot.slane %v1790, %v1794
          %v1797 = vadd.f32 %v1795, 0.0
          %v1798 = vld [vmem:[#allocation5] sm:$0xff]
          %v1799 = vld [vmem:[#allocation4] sm:$0xff]
          %v1800 = vrcp.pop %v1799
          %1802 = vset.pattern.permute.xlu0 0
          %1803 = vperm.xlu0 %1802, %v1800
          %v1804 = vpop.permute.xlu0 %1803
          %v1806 = vmul.f32 %v1798, %v1804
          %1807 = vmatprep.subr.mxu0 0.0
          %1808 = vmatpush1.msra.mxu0 %v1726
          %1809 = vmatprep.subr.mxu0 0.0
          %1810 = vmatpush1.msra.mxu0 %v1727
          %1811 = vmatprep.subr.mxu0 0.0
          %1812 = vmatpush1.msra.mxu0 %v1728
          %1813 = vmatprep.subr.mxu0 0.0
          %1814 = vmatpush1.msra.mxu0 %v1729
          %1815 = vmatprep.subr.mxu0 0.0
          %1816 = vmatpush1.msra.mxu0 %v1730
          %1817 = vmatprep.subr.mxu0 0.0
          %1818 = vmatpush1.msra.mxu0 %v1731
          %1819 = vmatprep.subr.mxu0 0.0
          %1820 = vmatpush1.msra.mxu0 %v1732
          %1821 = vmatprep.subr.mxu0 0.0
          %1822 = vmatpush1.msra.mxu0 %v1733
          %1823 = vmatprep.subr.mxu0 0.0
          %1824 = vmatpush1.msra.mxu0 %v1734
          %1825 = vmatprep.subr.mxu0 0.0
          %1826 = vmatpush1.msra.mxu0 %v1735
          %1827 = vmatprep.subr.mxu0 0.0
          %1828 = vmatpush1.msra.mxu0 %v1736
          %1829 = vmatprep.subr.mxu0 0.0
          %1830 = vmatpush1.msra.mxu0 %v1737
          %1831 = vmatprep.subr.mxu0 0.0
          %1832 = vmatpush1.msra.mxu0 %v1738
          %1833 = vmatprep.subr.mxu0 0.0
          %1834 = vmatpush1.msra.mxu0 %v1739
          %1835 = vmatprep.subr.mxu0 0.0
          %1836 = vmatpush1.msra.mxu0 %v1740
          %1837 = vmatprep.subr.mxu0 0.0
          %1838 = vmatpush1.msra.mxu0 %v1741
          %1839 = vmatprep.subr.mxu0 0.0
          %1840 = vmatpush1.msra.mxu0 0.0
          %1841 = vmatprep.subr.mxu0 0.0
          %1842 = vmatpush1.msra.mxu0 0.0
          %1843 = vmatprep.subr.mxu0 0.0
          %1844 = vmatpush1.msra.mxu0 0.0
          %1845 = vmatprep.subr.mxu0 0.0
          %1846 = vmatpush1.msra.mxu0 0.0
          %1847 = vmatprep.subr.mxu0 0.0
          %1848 = vmatpush1.msra.mxu0 0.0
          %1849 = vmatprep.subr.mxu0 0.0
          %1850 = vmatpush1.msra.mxu0 0.0
          %1851 = vmatprep.subr.mxu0 0.0
          %1852 = vmatpush1.msra.mxu0 0.0
          %1853 = vmatprep.subr.mxu0 0.0
          %1854 = vmatpush1.msra.mxu0 0.0
          %1855 = vmatprep.subr.mxu0 0.0
          %1856 = vmatpush1.msra.mxu0 0.0
          %1857 = vmatprep.subr.mxu0 0.0
          %1858 = vmatpush1.msra.mxu0 0.0
          %1859 = vmatprep.subr.mxu0 0.0
          %1860 = vmatpush1.msra.mxu0 0.0
          %1861 = vmatprep.subr.mxu0 0.0
          %1862 = vmatpush1.msra.mxu0 0.0
          %1863 = vmatprep.subr.mxu0 0.0
          %1864 = vmatpush1.msra.mxu0 0.0
          %1865 = vmatprep.subr.mxu0 0.0
          %1866 = vmatpush1.msra.mxu0 0.0
          %1867 = vmatprep.subr.mxu0 0.0
          %1868 = vmatpush1.msra.mxu0 0.0
          %1869 = vmatprep.subr.mxu0 0.0
          %1870 = vmatpush1.msra.mxu0 0.0
          %1871 = vmatprep.mubr.f32.mxu0 0.0
          %1872 = vmatmul.mubr.f32.gmra.mrb[0].mxu0 %v1806
          %v1873 = vpop.f32.mrb[0].mxu0
          %v1874 = vadd.f32 0.0, %v1873
          %v1875 = vpop.f32.mrb[0].mxu0
          %1876 = vdwg.mxu0
          %v1877 = vadd.f32 %v1797, %v1874
          %v1878 = vld [vmem:[%s1281] sm:$0xff]
          %v1879 = vld [vmem:[%s1273] sm:$0xff]
          %v1880 = vrcp.pop %v1879
          %1882 = vset.pattern.permute.xlu0 0
          %1883 = vperm.xlu0 %1882, %v1880
          %v1884 = vpop.permute.xlu0 %1883
          %v1886 = vmul.f32 %v1878, %v1884
          %1887 = vmatprep.subr.mxu0 0.0
          %1888 = vmatpush1.msra.mxu0 %v1742
          %1889 = vmatprep.subr.mxu0 0.0
          %1890 = vmatpush1.msra.mxu0 %v1743
          %1891 = vmatprep.subr.mxu0 0.0
          %1892 = vmatpush1.msra.mxu0 %v1744
          %1893 = vmatprep.subr.mxu0 0.0
          %1894 = vmatpush1.msra.mxu0 %v1745
          %1895 = vmatprep.subr.mxu0 0.0
          %1896 = vmatpush1.msra.mxu0 %v1746
          %1897 = vmatprep.subr.mxu0 0.0
          %1898 = vmatpush1.msra.mxu0 %v1747
          %1899 = vmatprep.subr.mxu0 0.0
          %1900 = vmatpush1.msra.mxu0 %v1748
          %1901 = vmatprep.subr.mxu0 0.0
          %1902 = vmatpush1.msra.mxu0 %v1749
          %1903 = vmatprep.subr.mxu0 0.0
          %1904 = vmatpush1.msra.mxu0 %v1750
          %1905 = vmatprep.subr.mxu0 0.0
          %1906 = vmatpush1.msra.mxu0 %v1751
          %1907 = vmatprep.subr.mxu0 0.0
          %1908 = vmatpush1.msra.mxu0 %v1752
          %1909 = vmatprep.subr.mxu0 0.0
          %1910 = vmatpush1.msra.mxu0 %v1753
          %1911 = vmatprep.subr.mxu0 0.0
          %1912 = vmatpush1.msra.mxu0 %v1754
          %1913 = vmatprep.subr.mxu0 0.0
          %1914 = vmatpush1.msra.mxu0 %v1755
          %1915 = vmatprep.subr.mxu0 0.0
          %1916 = vmatpush1.msra.mxu0 %v1756
          %1917 = vmatprep.subr.mxu0 0.0
          %1918 = vmatpush1.msra.mxu0 %v1757
          %1919 = vmatprep.subr.mxu0 0.0
          %1920 = vmatpush1.msra.mxu0 0.0
          %1921 = vmatprep.subr.mxu0 0.0
          %1922 = vmatpush1.msra.mxu0 0.0
          %1923 = vmatprep.subr.mxu0 0.0
          %1924 = vmatpush1.msra.mxu0 0.0
          %1925 = vmatprep.subr.mxu0 0.0
          %1926 = vmatpush1.msra.mxu0 0.0
          %1927 = vmatprep.subr.mxu0 0.0
          %1928 = vmatpush1.msra.mxu0 0.0
          %1929 = vmatprep.subr.mxu0 0.0
          %1930 = vmatpush1.msra.mxu0 0.0
          %1931 = vmatprep.subr.mxu0 0.0
          %1932 = vmatpush1.msra.mxu0 0.0
          %1933 = vmatprep.subr.mxu0 0.0
          %1934 = vmatpush1.msra.mxu0 0.0
          %1935 = vmatprep.subr.mxu0 0.0
          %1936 = vmatpush1.msra.mxu0 0.0
          %1937 = vmatprep.subr.mxu0 0.0
          %1938 = vmatpush1.msra.mxu0 0.0
          %1939 = vmatprep.subr.mxu0 0.0
          %1940 = vmatpush1.msra.mxu0 0.0
          %1941 = vmatprep.subr.mxu0 0.0
          %1942 = vmatpush1.msra.mxu0 0.0
          %1943 = vmatprep.subr.mxu0 0.0
          %1944 = vmatpush1.msra.mxu0 0.0
          %1945 = vmatprep.subr.mxu0 0.0
          %1946 = vmatpush1.msra.mxu0 0.0
          %1947 = vmatprep.subr.mxu0 0.0
          %1948 = vmatpush1.msra.mxu0 0.0
          %1949 = vmatprep.subr.mxu0 0.0
          %1950 = vmatpush1.msra.mxu0 0.0
          %1951 = vmatprep.mubr.f32.mxu0 0.0
          %1952 = vmatmul.mubr.f32.gmra.mrb[0].mxu0 %v1886
          %v1953 = vpop.f32.mrb[0].mxu0
          %v1954 = vadd.f32 0.0, %v1953
          %v1955 = vpop.f32.mrb[0].mxu0
          %1956 = vdwg.mxu0
          %v1957 = vadd.f32 %v1877, %v1954
          %v1958 = vld [vmem:[%s1460] sm:$0xff]
          %v1959 = vld [vmem:[%s1452] sm:$0xff]
          %v1960 = vrcp.pop %v1959
          %1962 = vset.pattern.permute.xlu0 0
          %1963 = vperm.xlu0 %1962, %v1960
          %v1964 = vpop.permute.xlu0 %1963
          %v1966 = vmul.f32 %v1958, %v1964
          %1967 = vmatprep.subr.mxu0 0.0
          %1968 = vmatpush1.msra.mxu0 %v1758
          %1969 = vmatprep.subr.mxu0 0.0
          %1970 = vmatpush1.msra.mxu0 %v1759
          %1971 = vmatprep.subr.mxu0 0.0
          %1972 = vmatpush1.msra.mxu0 %v1760
          %1973 = vmatprep.subr.mxu0 0.0
          %1974 = vmatpush1.msra.mxu0 %v1761
          %1975 = vmatprep.subr.mxu0 0.0
          %1976 = vmatpush1.msra.mxu0 %v1762
          %1977 = vmatprep.subr.mxu0 0.0
          %1978 = vmatpush1.msra.mxu0 %v1763
          %1979 = vmatprep.subr.mxu0 0.0
          %1980 = vmatpush1.msra.mxu0 %v1764
          %1981 = vmatprep.subr.mxu0 0.0
          %1982 = vmatpush1.msra.mxu0 %v1765
          %1983 = vmatprep.subr.mxu0 0.0
          %1984 = vmatpush1.msra.mxu0 %v1766
          %1985 = vmatprep.subr.mxu0 0.0
          %1986 = vmatpush1.msra.mxu0 %v1767
          %1987 = vmatprep.subr.mxu0 0.0
          %1988 = vmatpush1.msra.mxu0 %v1768
          %1989 = vmatprep.subr.mxu0 0.0
          %1990 = vmatpush1.msra.mxu0 %v1769
          %1991 = vmatprep.subr.mxu0 0.0
          %1992 = vmatpush1.msra.mxu0 %v1770
          %1993 = vmatprep.subr.mxu0 0.0
          %1994 = vmatpush1.msra.mxu0 %v1771
          %1995 = vmatprep.subr.mxu0 0.0
          %1996 = vmatpush1.msra.mxu0 %v1772
          %1997 = vmatprep.subr.mxu0 0.0
          %1998 = vmatpush1.msra.mxu0 %v1773
          %1999 = vmatprep.subr.mxu0 0.0
          %2000 = vmatpush1.msra.mxu0 0.0
          %2001 = vmatprep.subr.mxu0 0.0
          %2002 = vmatpush1.msra.mxu0 0.0
          %2003 = vmatprep.subr.mxu0 0.0
          %2004 = vmatpush1.msra.mxu0 0.0
          %2005 = vmatprep.subr.mxu0 0.0
          %2006 = vmatpush1.msra.mxu0 0.0
          %2007 = vmatprep.subr.mxu0 0.0
          %2008 = vmatpush1.msra.mxu0 0.0
          %2009 = vmatprep.subr.mxu0 0.0
          %2010 = vmatpush1.msra.mxu0 0.0
          %2011 = vmatprep.subr.mxu0 0.0
          %2012 = vmatpush1.msra.mxu0 0.0
          %2013 = vmatprep.subr.mxu0 0.0
          %2014 = vmatpush1.msra.mxu0 0.0
          %2015 = vmatprep.subr.mxu0 0.0
          %2016 = vmatpush1.msra.mxu0 0.0
          %2017 = vmatprep.subr.mxu0 0.0
          %2018 = vmatpush1.msra.mxu0 0.0
          %2019 = vmatprep.subr.mxu0 0.0
          %2020 = vmatpush1.msra.mxu0 0.0
          %2021 = vmatprep.subr.mxu0 0.0
          %2022 = vmatpush1.msra.mxu0 0.0
          %2023 = vmatprep.subr.mxu0 0.0
          %2024 = vmatpush1.msra.mxu0 0.0
          %2025 = vmatprep.subr.mxu0 0.0
          %2026 = vmatpush1.msra.mxu0 0.0
          %2027 = vmatprep.subr.mxu0 0.0
          %2028 = vmatpush1.msra.mxu0 0.0
          %2029 = vmatprep.subr.mxu0 0.0
          %2030 = vmatpush1.msra.mxu0 0.0
          %2031 = vmatprep.mubr.f32.mxu0 0.0
          %2032 = vmatmul.mubr.f32.gmra.mrb[0].mxu0 %v1966
          %v2033 = vpop.f32.mrb[0].mxu0
          %v2034 = vadd.f32 0.0, %v2033
          %v2035 = vpop.f32.mrb[0].mxu0
          %2036 = vdwg.mxu0
          %v2037 = vadd.f32 %v1957, %v2034
          %v2038 = vld [vmem:[%s1639] sm:$0xff]
          %v2039 = vld [vmem:[%s1631] sm:$0xff]
          %v2040 = vrcp.pop %v2039
          %2042 = vset.pattern.permute.xlu0 0
          %2043 = vperm.xlu0 %2042, %v2040
          %v2044 = vpop.permute.xlu0 %2043
          %v2046 = vmul.f32 %v2038, %v2044
          %2047 = vmatprep.subr.mxu0 0.0
          %2048 = vmatpush1.msra.mxu0 %v1774
          %2049 = vmatprep.subr.mxu0 0.0
          %2050 = vmatpush1.msra.mxu0 %v1775
          %2051 = vmatprep.subr.mxu0 0.0
          %2052 = vmatpush1.msra.mxu0 %v1776
          %2053 = vmatprep.subr.mxu0 0.0
          %2054 = vmatpush1.msra.mxu0 %v1777
          %2055 = vmatprep.subr.mxu0 0.0
          %2056 = vmatpush1.msra.mxu0 %v1778
          %2057 = vmatprep.subr.mxu0 0.0
          %2058 = vmatpush1.msra.mxu0 %v1779
          %2059 = vmatprep.subr.mxu0 0.0
          %2060 = vmatpush1.msra.mxu0 %v1780
          %2061 = vmatprep.subr.mxu0 0.0
          %2062 = vmatpush1.msra.mxu0 %v1781
          %2063 = vmatprep.subr.mxu0 0.0
          %2064 = vmatpush1.msra.mxu0 %v1782
          %2065 = vmatprep.subr.mxu0 0.0
          %2066 = vmatpush1.msra.mxu0 %v1783
          %2067 = vmatprep.subr.mxu0 0.0
          %2068 = vmatpush1.msra.mxu0 %v1784
          %2069 = vmatprep.subr.mxu0 0.0
          %2070 = vmatpush1.msra.mxu0 %v1785
          %2071 = vmatprep.subr.mxu0 0.0
          %2072 = vmatpush1.msra.mxu0 %v1786
          %2073 = vmatprep.subr.mxu0 0.0
          %2074 = vmatpush1.msra.mxu0 %v1787
          %2075 = vmatprep.subr.mxu0 0.0
          %2076 = vmatpush1.msra.mxu0 %v1788
          %2077 = vmatprep.subr.mxu0 0.0
          %2078 = vmatpush1.msra.mxu0 %v1789
          %2079 = vmatprep.subr.mxu0 0.0
          %2080 = vmatpush1.msra.mxu0 0.0
          %2081 = vmatprep.subr.mxu0 0.0
          %2082 = vmatpush1.msra.mxu0 0.0
          %2083 = vmatprep.subr.mxu0 0.0
          %2084 = vmatpush1.msra.mxu0 0.0
          %2085 = vmatprep.subr.mxu0 0.0
          %2086 = vmatpush1.msra.mxu0 0.0
          %2087 = vmatprep.subr.mxu0 0.0
          %2088 = vmatpush1.msra.mxu0 0.0
          %2089 = vmatprep.subr.mxu0 0.0
          %2090 = vmatpush1.msra.mxu0 0.0
          %2091 = vmatprep.subr.mxu0 0.0
          %2092 = vmatpush1.msra.mxu0 0.0
          %2093 = vmatprep.subr.mxu0 0.0
          %2094 = vmatpush1.msra.mxu0 0.0
          %2095 = vmatprep.subr.mxu0 0.0
          %2096 = vmatpush1.msra.mxu0 0.0
          %2097 = vmatprep.subr.mxu0 0.0
          %2098 = vmatpush1.msra.mxu0 0.0
          %2099 = vmatprep.subr.mxu0 0.0
          %2100 = vmatpush1.msra.mxu0 0.0
          %2101 = vmatprep.subr.mxu0 0.0
          %2102 = vmatpush1.msra.mxu0 0.0
          %2103 = vmatprep.subr.mxu0 0.0
          %2104 = vmatpush1.msra.mxu0 0.0
          %2105 = vmatprep.subr.mxu0 0.0
          %2106 = vmatpush1.msra.mxu0 0.0
          %2107 = vmatprep.subr.mxu0 0.0
          %2108 = vmatpush1.msra.mxu0 0.0
          %2109 = vmatprep.subr.mxu0 0.0
          %2110 = vmatpush1.msra.mxu0 0.0
          %2111 = vmatprep.mubr.f32.mxu0 0.0
          %2112 = vmatmul.mubr.f32.gmra.mrb[0].mxu0 %v2046
          %v2113 = vpop.f32.mrb[0].mxu0
          %v2114 = vadd.f32 0.0, %v2113
          %v2115 = vpop.f32.mrb[0].mxu0
          %2116 = vdwg.mxu0
          %v2117 = vadd.f32 %v2037, %v2114
          %2118 = vst [vmem:[%s358] sm:$0xff] %v2117
        $region76: #{_lambda_.1} parent=43 // pred_fallthru
          _
        %s2119 = sand.u32 %s186, 1
        %s2120 = scalar_lea.sflag [#allocation8], %s2119
        %s2121 = sand.u32 %s186, 1
        %s2122 = smul.addr %s2121, 8
        %s2123 = scalar_lea.vmem [#allocation17], %s2122
        // Predicated region
        $region77: #{_lambda_.1} parent=43 // pred_check
          %p2124 = pneg %p196
        $region78: #{_lambda_.1} parent=43 // pred_check_branch
          %2126 = sbr.rel (%p2124) target = $region80
        $region79: #{_lambda_.1} parent=43 // pred_region
          %s2128 = ssub.s32 128, 128
          %2129 = vsyncadd %s2120, %s2128
          %s2130 = sadd.s32 %s32, %s31
          %s2131 = smul.addr %s2130, 128
          %s2132 = scalar_lea.hbm %s6, %s2131
          %s2134 = sshll.u32 %s2123, 4
          %s2135 = int_to_ptr.vmem [resolvable:$true] %s2134
          %2137 = dma.vmem_to_hbm [thread:$0]  %s2135, 128, %s2132, %s2120
        $region80: #{_lambda_.1} parent=43 // pred_fallthru
          _
      $region44: #{_lambda_.1} parent=5 // pred_fallthru
        _
      %p2138 = scmp.le.s32.totalorder 2, %s21
      // Predicated region
      $region81: #{_lambda_.1} parent=5 // pred_check
        %p2139 = pneg %p2138
      $region82: #{_lambda_.1} parent=5 // pred_check_branch
        %2141 = sbr.rel (%p2139) target = $region84
      $region83: #{_lambda_.1} parent=5 // pred_region
        %s2142 = ssub.s32 %s21, 2
        // Predicated region
        $region85: #{_lambda_.1} parent=83 // pred_check
          %p2143 = pneg %p202
        $region86: #{_lambda_.1} parent=83 // pred_check_branch
          %2145 = sbr.rel (%p2143) target = $region88
        $region87: #{_lambda_.1} parent=83 // pred_region
          %s2146 = sand.u32 %s187, 1
          %s2147 = scalar_lea.sflag [#allocation8], %s2146
          %s2148 = sand.u32 %s187, 1
          %s2149 = smul.addr %s2148, 8
          %s2150 = scalar_lea.vmem [#allocation17], %s2149
          %2151 = dma.done %s2147, 128
        $region88: #{_lambda_.1} parent=83 // pred_fallthru
          _
      $region84: #{_lambda_.1} parent=5 // pred_fallthru
        _
    $region6: #{_lambda_.1} parent=1 // loop_footer
      %s25 = sadd.s32 1, %s21
    $region7: #{_lambda_.1} parent=1 // loop_footer_branch
      %20 = sbr.rel target = $region3
    $region8: #{_lambda_.1} parent=1 // loop_exit
      _
    %2152 = vsyncpa [#allocation7], 1
    %s2153 = scalar_lea.sflag [#allocation7], 1
    %2154 = vsyncpa %s2153, 1
    %2155 = vsyncpa [#allocation10], 1
    %2156 = vsyncpa [#allocation13], 1
    %2157 = vsyncpa [#allocation16], 1
    %2158 = vsyncpa [#allocation8], 1
    %s2159 = scalar_lea.sflag [#allocation8], 1
    %2160 = vsyncpa %s2159, 1

</llo_original>
